<compile_context>
chip_gen: v7x
topology: tpu7x:2x2x1
jax: 0.10.0
libtpu: 0.0.40
codegen_flags: <defaults>
</compile_context>

<pallas_src>
import functools

import jax
import jax.numpy as jnp
from jax.experimental import pallas as pl
from jax.experimental.pallas import tpu as pltpu


_LANE = 128       # lane width (last dim multiple)
_SUBLANE = 8      # sublane width (second-to-last dim multiple)


def _round_up(a, b):
    return ((a + b - 1) // b) * b


def _cdiv(a, b):
    return (a + b - 1) // b


# --------------------------------------------------------------------------
# Hardware queries (cached, best-effort with safe fallbacks)
# --------------------------------------------------------------------------
_VMEM_CAP_CACHE = None
_NUM_CORES_CACHE = None
_SINGLE_BUFFER_OK = None


def _device_kind():
    try:
        return jax.devices()[0].device_kind.lower()
    except Exception:
        return ""


def _tpu_vmem_bytes():
    """Per-TensorCore VMEM capacity (bytes), conservative if unknown."""
    global _VMEM_CAP_CACHE
    if _VMEM_CAP_CACHE is not None:
        return _VMEM_CAP_CACHE
    kind = _device_kind()
    guess = (64 << 20) if "v7" in kind else (128 << 20)
    try:
        cap = int(pltpu.get_tpu_info().vmem_capacity_bytes)
        if cap > 0:
            guess = min(guess, cap)
    except Exception:
        pass
    _VMEM_CAP_CACHE = guess
    return guess


def _tpu_num_cores():
    """TensorCores per chip (megacore): 2 on v4/v5p/v7x, else 1."""
    global _NUM_CORES_CACHE
    if _NUM_CORES_CACHE is not None:
        return _NUM_CORES_CACHE
    kind = _device_kind()
    if ("lite" in kind) or ("v5e" in kind) or ("v6e" in kind) or ("v6" in kind and "lite" in kind):
        cores = 1
    elif ("v7" in kind) or ("v4" in kind) or ("v5p" in kind) or ("v5" in kind and "lite" not in kind):
        cores = 2
    else:
        cores = 1
    _NUM_CORES_CACHE = cores
    return cores


def _single_buffering_supported():
    """Probe once whether pipeline_mode=pl.Buffered(1) works on this install."""
    global _SINGLE_BUFFER_OK
    if _SINGLE_BUFFER_OK is not None:
        return _SINGLE_BUFFER_OK
    try:
        def probe_kernel(x_ref, w_ref, o_ref):
            o_ref[...] = x_ref[...] + w_ref[...]

        x = jnp.zeros((16, 128), jnp.float32)
        w = jnp.ones((8, 128), jnp.float32)
        out = pl.pallas_call(
            probe_kernel,
            out_shape=jax.ShapeDtypeStruct((16, 128), jnp.float32),
            grid_spec=pltpu.PrefetchScalarGridSpec(
                num_scalar_prefetch=0,
                grid=(2,),
                in_specs=[
                    pl.BlockSpec((8, 128), lambda i: (i, 0)),
                    pl.BlockSpec((8, 128), lambda i: (0, 0),
                                 pipeline_mode=pl.Buffered(1)),
                ],
                out_specs=pl.BlockSpec((8, 128), lambda i: (i, 0)),
            ),
        )(x, w)
        jax.block_until_ready(out)
        _SINGLE_BUFFER_OK = bool(jnp.all(out == 1.0))
    except Exception:
        _SINGLE_BUFFER_OK = False
    return _SINGLE_BUFFER_OK


# --------------------------------------------------------------------------
# Row tiling helpers
# --------------------------------------------------------------------------
def _initial_row_tile(m, num_cores, tm_max=512):
    """Large row tile; on 2-TC chips keep >= 2*num_cores grid steps so the
    per-core pipelines have something to overlap.  Single-TC chips get one
    big tile (no forced split)."""
    m8 = _round_up(m, _SUBLANE)
    tm = min(tm_max, m8)
    if num_cores > 1:
        min_steps = 2 * num_cores
        if m8 >= min_steps * _SUBLANE and _cdiv(m8, tm) < min_steps:
            tm = max(_SUBLANE, _round_up(_cdiv(m8, min_steps), _SUBLANE))
    return tm


def _tm_candidates(tm0):
    """tm0 then halvings down to 128 (try smaller tiles before giving up on
    the fused path)."""
    cands = [tm0]
    t = tm0
    while t > 128:
        t = max(128, _round_up(t // 2, _SUBLANE))
        if t != cands[-1]:
            cands.append(t)
    return cands


def _fused_resident_bytes(tm, k_pad, w_p, b_p, out_dtype, wb_buffers):
    """VMEM estimate for the fused path: x/out double-buffered, weights/biases
    x wb_buffers (1 if single-buffered), plus headroom for f32 activation
    staging of the widest layer."""
    widths = [w.shape[1] for w in w_p]
    max_w = max(widths + [k_pad])
    total = 2 * tm * k_pad * w_p[0].dtype.itemsize                     # x blocks
    total += 2 * tm * widths[-1] * jnp.dtype(out_dtype).itemsize       # out blocks
    total += wb_buffers * sum(int(w.size) * w.dtype.itemsize for w in w_p)
    total += wb_buffers * sum(int(b.size) * b.dtype.itemsize for b in b_p)
    total += 3 * tm * max_w * 4                                        # staged acts (f32)
    return total


# --------------------------------------------------------------------------
# Fused whole-MLP kernel: one row tile of nodes, all layers back to back.
# Weights stay resident in VMEM; activations never touch HBM.
# --------------------------------------------------------------------------
def _fused_mlp_kernel(*refs, num_layers):
    x_ref = refs[0]
    out_ref = refs[-1]
    wb = refs[1:1 + 2 * num_layers]

    h = x_ref[...]                                     # compute dtype (e.g. bf16)
    for layer in range(num_layers):
        w = wb[2 * layer][...]
        b = wb[2 * layer + 1][...]                     # (1, N) f32
        y = jnp.dot(h, w, preferred_element_type=jnp.float32)
        y = y + b                                      # f32 bias add
        if layer < num_layers - 1:
            # ReLU in f32, then carry the activation narrow between layers.
            h = jnp.maximum(y, 0.0).astype(w.dtype)
        else:
            h = y
    out_ref[...] = h.astype(out_ref.dtype)


def _mlp_fused_pallas(x, weights, biases, *, tm, out_dtype, vmem_limit,
                      single_buffer):
    m, k = x.shape
    n = weights[-1].shape[1]
    num_layers = len(weights)

    wb_kwargs = {"pipeline_mode": pl.Buffered(1)} if single_buffer else {}

    in_specs = [pl.BlockSpec((tm, k), lambda i: (i, 0))]
    operands = [x]
    for w, b in zip(weights, biases):
        kin, nout = w.shape
        # Constant blocks: same tile every grid step -> single-buffer if possible.
        in_specs.append(pl.BlockSpec((kin, nout), lambda i: (0, 0), **wb_kwargs))
        in_specs.append(pl.BlockSpec((1, nout), lambda i: (0, 0), **wb_kwargs))
        operands.extend([w, b])

    return pl.pallas_call(
        functools.partial(_fused_mlp_kernel, num_layers=num_layers),
        out_shape=jax.ShapeDtypeStruct((m, n), out_dtype),
        grid_spec=pltpu.PrefetchScalarGridSpec(
            num_scalar_prefetch=0,
            grid=(m // tm,),
            in_specs=in_specs,
            out_specs=pl.BlockSpec((tm, n), lambda i: (i, 0)),
        ),
        compiler_params=pltpu.CompilerParams(
            dimension_semantics=("parallel",),
            vmem_limit_bytes=vmem_limit),
    )(*operands)


# --------------------------------------------------------------------------
# Fallback: per-layer K-tiled linear with f32 VMEM accumulator (only when
# resident weights do not fit VMEM, e.g. very wide layers on v7x).
# --------------------------------------------------------------------------
def _linear_tiled_kernel(x_ref, w_ref, b_ref, o_ref, acc_ref, *, apply_relu):
    kk = pl.program_id(2)

    @pl.when(kk == 0)
    def _():
        acc_ref[...] = jnp.zeros_like(acc_ref)

    acc_ref[...] += jnp.dot(x_ref[...], w_ref[...],
                            preferred_element_type=jnp.float32)

    @pl.when(kk == pl.num_programs(2) - 1)
    def _():
        y = acc_ref[...] + b_ref[...]
        if apply_relu:
            y = jnp.maximum(y, 0.0)
        o_ref[...] = y.astype(o_ref.dtype)


def _feature_tile(dim, max_tile=512):
    """Largest multiple-of-128 tile <= max_tile that divides dim (dim is
    always a multiple of 128 after param preparation), so never below 128."""
    assert dim % _LANE == 0, "feature dims must be padded to 128"
    t = min(max_tile, dim)
    t = (t // _LANE) * _LANE
    while dim % t != 0:
        t -= _LANE
    return t


def _linear_tiled_pallas(x, w, b, *, apply_relu, out_dtype, tm, vmem_limit):
    m, k = x.shape
    _, n = w.shape
    assert m % tm == 0, "rows must be padded to the row tile"
    tn = _feature_tile(n)
    tk = _feature_tile(k)

    return pl.pallas_call(
        functools.partial(_linear_tiled_kernel, apply_relu=apply_relu),
        out_shape=jax.ShapeDtypeStruct((m, n), out_dtype),
        grid_spec=pltpu.PrefetchScalarGridSpec(
            num_scalar_prefetch=0,
            grid=(m // tm, n // tn, k // tk),
            in_specs=[
                pl.BlockSpec((tm, tk), lambda i, j, kk: (i, kk)),
                pl.BlockSpec((tk, tn), lambda i, j, kk: (kk, j)),
                pl.BlockSpec((1, tn), lambda i, j, kk: (0, j)),
            ],
            out_specs=pl.BlockSpec((tm, tn), lambda i, j, kk: (i, j)),
            scratch_shapes=[pltpu.VMEM((tm, tn), jnp.float32)],
        ),
        compiler_params=pltpu.CompilerParams(
            dimension_semantics=("parallel", "parallel", "arbitrary"),
            vmem_limit_bytes=vmem_limit),
    )(x, w, b)


# --------------------------------------------------------------------------
# Parameter preparation (do ONCE at init; reused every forward)
# --------------------------------------------------------------------------
def prepare_mlp_generator_params(weights, biases, *, compute_dtype=jnp.bfloat16):
    """Pad every feature dim to a multiple of 128 lanes and cast weights to
    the compute dtype once.  Zero padding contributes exactly zero to every
    dot, so the math is unchanged.  Biases stay f32 (added post-accumulate)."""
    cdt = jnp.dtype(compute_dtype)
    k = weights[0].shape[0]
    k_pad = _round_up(k, _LANE)
    w_p, b_p = [], []
    kin = k_pad
    for w, b in zip(weights, biases):
        k_l, n_l = w.shape
        n_pad = _round_up(n_l, _LANE)
        w_p.append(jnp.pad(w.astype(cdt), ((0, kin - k_l), (0, n_pad - n_l))))
        b_p.append(jnp.pad(b.astype(jnp.float32), (0, n_pad - n_l)).reshape(1, n_pad))
        kin = n_pad
    return {
        "w": w_p, "b": b_p,
        "in_dim": k, "in_dim_pad": k_pad,
        "out_dim": weights[-1].shape[1], "out_dim_pad": w_p[-1].shape[1],
        "compute_dtype": cdt,
    }


# --------------------------------------------------------------------------
# Public forward
# --------------------------------------------------------------------------
def mlp_generator_forward(embedding, params, *, force_tiled=False):
    """Pallas implementation of MLP_generator.forward.

    embedding : (num_nodes, input_dim)
    params    : result of prepare_mlp_generator_params (preferred), or a
                (weights, biases) tuple of raw (in, out)-layout weights
                (pays a per-call pad/cast).
    """
    if not isinstance(params, dict):
        params = prepare_mlp_generator_params(*params)

    w_p, b_p = params["w"], params["b"]
    cdt = params["compute_dtype"]
    out_dtype = embedding.dtype
    m, k = embedding.shape
    assert k == params["in_dim"], "embedding feature dim mismatch"
    k_pad = params["in_dim_pad"]
    n_out, n_last_pad = params["out_dim"], params["out_dim_pad"]
    num_layers = len(w_p)

    vmem_cap = _tpu_vmem_bytes()
    vmem_limit = int(0.80 * vmem_cap)
    fused_budget = int(0.70 * vmem_cap)
    single_buf = _single_buffering_supported()
    wb_buffers = 1 if single_buf else 2

    num_cores = _tpu_num_cores()
    tm0 = _initial_row_tile(m, num_cores)

    # ---- choose execution path: shrink tm before abandoning fusion ------
    fused_tm = None
    if not force_tiled:
        for tm_try in _tm_candidates(tm0):
            if _fused_resident_bytes(tm_try, k_pad, w_p, b_p, out_dtype,
                                     wb_buffers) <= fused_budget:
                fused_tm = tm_try
                break

    if fused_tm is not None:
        # Fast path: one pallas_call, weights resident, activations in VMEM.
        tm = fused_tm
        m_pad = _round_up(_round_up(m, _SUBLANE), tm)
        x_p = jnp.pad(embedding.astype(cdt), ((0, m_pad - m), (0, k_pad - k)))
        out_p = _mlp_fused_pallas(x_p, w_p, b_p, tm=tm, out_dtype=out_dtype,
                                  vmem_limit=vmem_limit,
                                  single_buffer=single_buf)
    else:
        # Huge layers: weights don't fit VMEM -> per-layer K-tiled matmuls.
        # Intermediate activations stay in the compute dtype (halves HBM traffic).
        # TODO(synk): chain layers inside one pallas_call via pltpu.emit_pipeline
        # to avoid the per-layer activation HBM round trip entirely (v7x).
        m8 = _round_up(m, _SUBLANE)
        tm = 128 if m8 <= 128 else 256
        m_pad = _round_up(m8, tm)
        x_p = jnp.pad(embedding.astype(cdt), ((0, m_pad - m), (0, k_pad - k)))
        h = x_p
        for layer in range(num_layers):
            last = layer == num_layers - 1
            h = _linear_tiled_pallas(h, w_p[layer], b_p[layer],
                                     apply_relu=not last,
                                     out_dtype=out_dtype if last else cdt,
                                     tm=tm, vmem_limit=vmem_limit)
        out_p = h
        m_pad = out_p.shape[0]

    # ---- strip padding (avoid copies when nothing to strip) --------------
    if m_pad == m and n_last_pad == n_out:
        return out_p
    if n_last_pad == n_out:
        return out_p[:m]
    return out_p[:m, :n_out]


# --------------------------------------------------------------------------
# Init + reference
# --------------------------------------------------------------------------
def init_mlp_generator_params(key, input_dim, output_dim, num_layers):
    """nn.Linear-style init (uniform +/- 1/sqrt(fan_in)); weights stored
    transposed as (in, out)."""
    weights, biases = [], []
    in_dim = input_dim
    for _ in range(num_layers):
        key, kw, kb = jax.random.split(key, 3)
        bound = 1.0 / float(in_dim) ** 0.5
        w = jax.random.uniform(kw, (in_dim, output_dim), jnp.float32,
                               minval=-bound, maxval=bound)
        b = jax.random.uniform(kb, (output_dim,), jnp.float32,
                               minval=-bound, maxval=bound)
        weights.append(w)
        biases.append(b)
        in_dim = output_dim
    return weights, biases


def mlp_generator_reference(embedding, weights, biases):
    """Plain-JAX reference for correctness check."""
    h = embedding
    for layer in range(len(weights) - 1):
        h = jnp.maximum(h @ weights[layer] + biases[layer], 0.0)
    return h @ weights[-1] + biases[-1]


if __name__ == "__main__":
    num_nodes = 200          # deliberately NOT a multiple of the row tile
    input_dim = 64
    output_dim = 64
    num_layers = 3

    key = jax.random.PRNGKey(0)
    key, k_emb = jax.random.split(key)
    embedding = jax.random.normal(k_emb, (num_nodes, input_dim), jnp.float32)
    weights, biases = init_mlp_generator_params(
        key, input_dim, output_dim, num_layers)

    ref = mlp_generator_reference(embedding, weights, biases)
    ref_scale = float(jnp.max(jnp.abs(ref))) + 1e-6

    # f32 compute path (exact modulo f32 rounding).
    params_f32 = prepare_mlp_generator_params(weights, biases,
                                              compute_dtype=jnp.float32)
    out_f32 = jax.block_until_ready(mlp_generator_forward(embedding, params_f32))
    assert out_f32.shape == (num_nodes, output_dim)
    assert float(jnp.max(jnp.abs(out_f32 - ref))) / ref_scale < 1e-5

    # Default bf16 compute path (f32 accumulate; looser tolerance).
    params_bf16 = prepare_mlp_generator_params(weights, biases)
    out_bf16 = jax.block_until_ready(mlp_generator_forward(embedding, params_bf16))
    assert out_bf16.shape == (num_nodes, output_dim)
    assert float(jnp.max(jnp.abs(out_bf16 - ref))) / ref_scale < 5e-2

    # K-tiled per-layer fallback (auto-selected for huge layers / tight VMEM);
    # exercised explicitly here for coverage.
    out_tiled = jax.block_until_ready(
        mlp_generator_forward(embedding, params_f32, force_tiled=True))
    assert float(jnp.max(jnp.abs(out_tiled - ref))) / ref_scale < 1e-5

    print("KERNEL_OK")
</pallas_src>

<mosaic_0001>
module attributes {stable_mosaic.version = 11 : i64} {
  func.func @probe_kernel(%arg0: i32, %arg1: memref<8x128xf32, #tpu.memory_space<vmem>>, %arg2: memref<8x128xf32, #tpu.memory_space<vmem>>, %arg3: memref<8x128xf32, #tpu.memory_space<vmem>>) attributes {dimension_semantics = [#tpu.dimension_semantics<arbitrary>], iteration_bounds = array<i64: 2>, scalar_prefetch = 0 : i64, scratch_operands = 0 : i64, tpu.core_type = #tpu.core_type<tc>, window_params = [{transform_indices = @transform_0, window_bounds = array<i64: 8, 128>}, {pipeline_mode = #tpu.pipeline_mode<synchronous>, transform_indices = @transform_1, window_bounds = array<i64: 8, 128>}, {transform_indices = @transform_2, window_bounds = array<i64: 8, 128>}]} {
    %c0 = arith.constant 0 : index
    %c0_0 = arith.constant 0 : index
    %0 = vector.load %arg1[%c0, %c0_0] : memref<8x128xf32, #tpu.memory_space<vmem>>, vector<8x128xf32>
    %c0_1 = arith.constant 0 : index
    %c0_2 = arith.constant 0 : index
    %1 = vector.load %arg2[%c0_1, %c0_2] : memref<8x128xf32, #tpu.memory_space<vmem>>, vector<8x128xf32>
    %2 = arith.addf %0, %1 : vector<8x128xf32>
    %c0_3 = arith.constant 0 : index
    %c0_4 = arith.constant 0 : index
    %3 = vector.load %arg3[%c0_3, %c0_4] : memref<8x128xf32, #tpu.memory_space<vmem>>, vector<8x128xf32>
    tpu.vector_store %arg3[%c0_3, %c0_4], %2 {strides = array<i32>} : memref<8x128xf32, #tpu.memory_space<vmem>>, vector<8x128xf32>,
    return
  }
  func.func @transform_0(%arg0: i32) -> (i32, i32) {
    %c0_i32 = arith.constant 0 : i32
    %c0_i32_0 = arith.constant 0 : i32
    return %arg0, %c0_i32 : i32, i32
  }
  func.func @transform_1(%arg0: i32) -> (i32, i32) {
    %c0_i32 = arith.constant 0 : i32
    %c0_i32_0 = arith.constant 0 : i32
    %c0_i32_1 = arith.constant 0 : i32
    return %c0_i32, %c0_i32_0 : i32, i32
  }
  func.func @transform_2(%arg0: i32) -> (i32, i32) {
    %c0_i32 = arith.constant 0 : i32
    %c0_i32_0 = arith.constant 0 : i32
    return %arg0, %c0_i32 : i32, i32
  }
}

module attributes {stable_mosaic.version = 11 : i64} {
  func.func @_fused_mlp_kernel(%arg0: i32, %arg1: memref<200x128xf32, #tpu.memory_space<vmem>>, %arg2: memref<128x128xf32, #tpu.memory_space<vmem>>, %arg3: memref<1x128xf32, #tpu.memory_space<vmem>>, %arg4: memref<128x128xf32, #tpu.memory_space<vmem>>, %arg5: memref<1x128xf32, #tpu.memory_space<vmem>>, %arg6: memref<128x128xf32, #tpu.memory_space<vmem>>, %arg7: memref<1x128xf32, #tpu.memory_space<vmem>>, %arg8: memref<200x128xf32, #tpu.memory_space<vmem>>) attributes {dimension_semantics = [#tpu.dimension_semantics<parallel>], iteration_bounds = array<i64: 1>, scalar_prefetch = 0 : i64, scratch_operands = 0 : i64, tpu.core_type = #tpu.core_type<tc>, window_params = [{transform_indices = @transform_0, window_bounds = array<i64: 200, 128>}, {pipeline_mode = #tpu.pipeline_mode<synchronous>, transform_indices = @transform_1, window_bounds = array<i64: 128, 128>}, {pipeline_mode = #tpu.pipeline_mode<synchronous>, transform_indices = @transform_2, window_bounds = array<i64: 1, 128>}, {pipeline_mode = #tpu.pipeline_mode<synchronous>, transform_indices = @transform_3, window_bounds = array<i64: 128, 128>}, {pipeline_mode = #tpu.pipeline_mode<synchronous>, transform_indices = @transform_4, window_bounds = array<i64: 1, 128>}, {pipeline_mode = #tpu.pipeline_mode<synchronous>, transform_indices = @transform_5, window_bounds = array<i64: 128, 128>}, {pipeline_mode = #tpu.pipeline_mode<synchronous>, transform_indices = @transform_6, window_bounds = array<i64: 1, 128>}, {transform_indices = @transform_7, window_bounds = array<i64: 200, 128>}]} {
    %c0 = arith.constant 0 : index
    %c0_0 = arith.constant 0 : index
    %0 = vector.load %arg1[%c0, %c0_0] : memref<200x128xf32, #tpu.memory_space<vmem>>, vector<200x128xf32>
    %c0_1 = arith.constant 0 : index
    %c0_2 = arith.constant 0 : index
    %1 = vector.load %arg2[%c0_1, %c0_2] : memref<128x128xf32, #tpu.memory_space<vmem>>, vector<128x128xf32>
    %c0_3 = arith.constant 0 : index
    %c0_4 = arith.constant 0 : index
    %2 = vector.load %arg3[%c0_3, %c0_4] : memref<1x128xf32, #tpu.memory_space<vmem>>, vector<1x128xf32>
    %cst = arith.constant dense<0.000000e+00> : vector<200x128xf32>
    %3 = tpu.matmul %0, %1, %cst {dimension_numbers = #tpu.dot_dimension_numbers<[1], [0], [0], [1], [0, 0, 1, 1], [], []>} : vector<200x128xf32>, vector<128x128xf32>, vector<200x128xf32> -> vector<200x128xf32>
    %4 = vector.broadcast %2 : vector<1x128xf32> to vector<200x128xf32>
    %5 = arith.addf %3, %4 : vector<200x128xf32>
    %cst_5 = arith.constant 0.000000e+00 : f32
    %6 = vector.broadcast %cst_5 : f32 to vector<200x128xf32>
    %7 = arith.maximumf %5, %6 : vector<200x128xf32>
    %c0_6 = arith.constant 0 : index
    %c0_7 = arith.constant 0 : index
    %8 = vector.load %arg4[%c0_6, %c0_7] : memref<128x128xf32, #tpu.memory_space<vmem>>, vector<128x128xf32>
    %c0_8 = arith.constant 0 : index
    %c0_9 = arith.constant 0 : index
    %9 = vector.load %arg5[%c0_8, %c0_9] : memref<1x128xf32, #tpu.memory_space<vmem>>, vector<1x128xf32>
    %cst_10 = arith.constant dense<0.000000e+00> : vector<200x128xf32>
    %10 = tpu.matmul %7, %8, %cst_10 {dimension_numbers = #tpu.dot_dimension_numbers<[1], [0], [0], [1], [0, 0, 1, 1], [], []>} : vector<200x128xf32>, vector<128x128xf32>, vector<200x128xf32> -> vector<200x128xf32>
    %11 = vector.broadcast %9 : vector<1x128xf32> to vector<200x128xf32>
    %12 = arith.addf %10, %11 : vector<200x128xf32>
    %cst_11 = arith.constant 0.000000e+00 : f32
    %13 = vector.broadcast %cst_11 : f32 to vector<200x128xf32>
    %14 = arith.maximumf %12, %13 : vector<200x128xf32>
    %c0_12 = arith.constant 0 : index
    %c0_13 = arith.constant 0 : index
    %15 = vector.load %arg6[%c0_12, %c0_13] : memref<128x128xf32, #tpu.memory_space<vmem>>, vector<128x128xf32>
    %c0_14 = arith.constant 0 : index
    %c0_15 = arith.constant 0 : index
    %16 = vector.load %arg7[%c0_14, %c0_15] : memref<1x128xf32, #tpu.memory_space<vmem>>, vector<1x128xf32>
    %cst_16 = arith.constant dense<0.000000e+00> : vector<200x128xf32>
    %17 = tpu.matmul %14, %15, %cst_16 {dimension_numbers = #tpu.dot_dimension_numbers<[1], [0], [0], [1], [0, 0, 1, 1], [], []>} : vector<200x128xf32>, vector<128x128xf32>, vector<200x128xf32> -> vector<200x128xf32>
    %18 = vector.broadcast %16 : vector<1x128xf32> to vector<200x128xf32>
    %19 = arith.addf %17, %18 : vector<200x128xf32>
    %c0_17 = arith.constant 0 : index
    %c0_18 = arith.constant 0 : index
    %20 = vector.load %arg8[%c0_17, %c0_18] : memref<200x128xf32, #tpu.memory_space<vmem>>, vector<200x128xf32>
    tpu.vector_store %arg8[%c0_17, %c0_18], %19 {strides = array<i32>} : memref<200x128xf32, #tpu.memory_space<vmem>>, vector<200x128xf32>,
    return
  }
  func.func @transform_0(%arg0: i32) -> (i32, i32) {
    %c0_i32 = arith.constant 0 : i32
    %c0_i32_0 = arith.constant 0 : i32
    return %arg0, %c0_i32 : i32, i32
  }
  func.func @transform_1(%arg0: i32) -> (i32, i32) {
    %c0_i32 = arith.constant 0 : i32
    %c0_i32_0 = arith.constant 0 : i32
    %c0_i32_1 = arith.constant 0 : i32
    return %c0_i32, %c0_i32_0 : i32, i32
  }
  func.func @transform_2(%arg0: i32) -> (i32, i32) {
    %c0_i32 = arith.constant 0 : i32
    %c0_i32_0 = arith.constant 0 : i32
    %c0_i32_1 = arith.constant 0 : i32
    return %c0_i32, %c0_i32_0 : i32, i32
  }
  func.func @transform_3(%arg0: i32) -> (i32, i32) {
    %c0_i32 = arith.constant 0 : i32
    %c0_i32_0 = arith.constant 0 : i32
    %c0_i32_1 = arith.constant 0 : i32
    return %c0_i32, %c0_i32_0 : i32, i32
  }
  func.func @transform_4(%arg0: i32) -> (i32, i32) {
    %c0_i32 = arith.constant 0 : i32
    %c0_i32_0 = arith.constant 0 : i32
    %c0_i32_1 = arith.constant 0 : i32
    return %c0_i32, %c0_i32_0 : i32, i32
  }
  func.func @transform_5(%arg0: i32) -> (i32, i32) {
    %c0_i32 = arith.constant 0 : i32
    %c0_i32_0 = arith.constant 0 : i32
    %c0_i32_1 = arith.constant 0 : i32
    return %c0_i32, %c0_i32_0 : i32, i32
  }
  func.func @transform_6(%arg0: i32) -> (i32, i32) {
    %c0_i32 = arith.constant 0 : i32
    %c0_i32_0 = arith.constant 0 : i32
    %c0_i32_1 = arith.constant 0 : i32
    return %c0_i32, %c0_i32_0 : i32, i32
  }
  func.func @transform_7(%arg0: i32) -> (i32, i32) {
    %c0_i32 = arith.constant 0 : i32
    %c0_i32_0 = arith.constant 0 : i32
    return %arg0, %c0_i32 : i32, i32
  }
}

</mosaic_0001>

<llo_original>
// kernel: tpu_custom_call.1
$region0: #{tpu_custom_call.1}
  #allocation0 [shape = 'u32[]', space=smem, size = 0x4, offset = 0x4, fixed_abs, tag = 'smem constant byte address 0x4 - core index']
  #allocation1 [shape = 'u32[144,128]{1,0:T(1,128)}', space=vmem, size = 0x12000, scoped, tag = 'internal scratch']
  %s0 = inlined_call_operand.hbm [shape: f32[16,128], index: 0, kind: input, shape index: {}]
  %s1 = inlined_call_operand.hbm [shape: f32[8,128], index: 1, kind: input, shape index: {}]
  %s2 = inlined_call_operand.hbm [shape: f32[16,128], index: 2, kind: output, shape index: {}]
  %s3 = sld [smem:[#allocation0]]
  $region49: #{tpu_custom_call.1} parent=0
    _
  %s5 = ssub.s32 1, %s3
  %s6 = scalar_select 0, %s5, %s3
  $region1: #{tpu_custom_call.1} parent=0
    #allocation2 [shape = 'u8[8192]{0}', space=vmem, size = 0x2000, scoped, tag = 'input window, operand 0']
    #allocation3 [shape = 's32[2]{0}', space=sflag, size = 0x8, scoped, tag = 'scoped memory for tpu_custom_call.1']
    #allocation4 [shape = 's32[2]{0}', space=sflag, size = 0x8, scoped, tag = 'scoped memory for tpu_custom_call.1']
    #allocation5 [shape = 'u8[4096]{0}', space=vmem, size = 0x1000, scoped, tag = 'input window, operand 1, single buffered']
    #allocation6 [shape = 's32[1]{0}', space=sflag, size = 0x4, scoped, tag = 'scoped memory for tpu_custom_call.1']
    #allocation7 [shape = 'u8[8192]{0}', space=vmem, size = 0x2000, scoped, tag = 'output window, operand 0']
    %7 = vsyncpa [#allocation3], 0
    %s8 = scalar_lea.sflag [#allocation3], 1
    %9 = vsyncpa %s8, 0
    %10 = vsyncpa [#allocation6], 0
    %11 = vsyncpa [#allocation4], 0
    %s12 = scalar_lea.sflag [#allocation4], 1
    %13 = vsyncpa %s12, 0
    loop: start=0, step=1, limit=4
    $region2: #{tpu_custom_call.1} parent=1 // loop_pre_header
      _
    $region3: #{tpu_custom_call.1} parent=1 // loop_header
      %s15 = sphi 0, %s19
      %p16 = scmp.ge.s32.totalorder %s15, 4
      %s25 = sphi 0, %s27
      %s28 = sphi 0, %s25
      %s29 = sphi 0, %s28
      %s45 = sphi 0, %s29
      %s49 = sphi 0, %s49
      %s51 = sphi 0, %s49
      %s52 = sphi 0, %s51
      %s66 = sphi 0, %s52
      %s72 = sphi 0, %s74
      %s75 = sphi 0, %s72
      %s76 = sphi 0, %s75
      %s92 = sphi 0, %s76
    $region4: #{tpu_custom_call.1} parent=1 // loop_header_branch
      %18 = sbr.rel (%p16) target = $region8
    $region5: #{tpu_custom_call.1} parent=1 // loop_body
      %s20 = ssub.s32 %s15, 1
      %s21 = ssub.s32 %s15, 2
      %s22 = sadd.s32 %s15, 1
      %s23 = ssub.s32 %s15, %s22
      %p24 = scmp.eq.s32.totalorder %s23, 0
      %s26 = sadd.s32 %s25, 1
      %s27 = scalar_select %p24, %s25, %s26
      %p30 = pneg %p24
      %p31 = scmp.eq.s32.totalorder %s15, 1
      %p32 = por %p30, %p31
      %p33 = scmp.ne.s32.totalorder %s25, %s28
      %p34 = scmp.eq.s32.totalorder %s15, 0
      %p35 = por %p33, %p34
      %p36 = scmp.ne.s32.totalorder %s25, %s28
      %p37 = scmp.eq.s32.totalorder %s20, 1
      %p38 = por %p36, %p37
      %p39 = scmp.ne.s32.totalorder %s28, %s29
      %p40 = scmp.eq.s32.totalorder %s20, 0
      %p41 = por %p39, %p40
      %p42 = scmp.ne.s32.totalorder %s28, %s29
      %p43 = scmp.eq.s32.totalorder %s21, 1
      %p44 = por %p42, %p43
      %p46 = scmp.ne.s32.totalorder %s29, %s45
      %p47 = scmp.eq.s32.totalorder %s21, 0
      %p48 = por %p46, %p47
      %s50 = sadd.s32 %s49, 1
      %p53 = scmp.eq.s32.totalorder %s15, 1
      %p54 = scmp.ne.s32.totalorder %s49, %s51
      %p55 = scmp.eq.s32.totalorder %s15, 0
      %p56 = por %p54, %p55
      %p57 = scmp.ne.s32.totalorder %s49, %s51
      %p58 = scmp.eq.s32.totalorder %s20, 1
      %p59 = por %p57, %p58
      %p60 = scmp.ne.s32.totalorder %s51, %s52
      %p61 = scmp.eq.s32.totalorder %s20, 0
      %p62 = por %p60, %p61
      %p63 = scmp.ne.s32.totalorder %s51, %s52
      %p64 = scmp.eq.s32.totalorder %s21, 1
      %p65 = por %p63, %p64
      %p67 = scmp.ne.s32.totalorder %s52, %s66
      %p68 = scmp.eq.s32.totalorder %s21, 0
      %p69 = por %p67, %p68
      %s70 = ssub.s32 %s15, %s22
      %p71 = scmp.eq.s32.totalorder %s70, 0
      %s73 = sadd.s32 %s72, 1
      %s74 = scalar_select %p71, %s72, %s73
      %p77 = pneg %p71
      %p78 = scmp.eq.s32.totalorder %s15, 1
      %p79 = por %p77, %p78
      %p80 = scmp.ne.s32.totalorder %s72, %s75
      %p81 = scmp.eq.s32.totalorder %s15, 0
      %p82 = por %p80, %p81
      %p83 = scmp.ne.s32.totalorder %s72, %s75
      %p84 = scmp.eq.s32.totalorder %s20, 1
      %p85 = por %p83, %p84
      %p86 = scmp.ne.s32.totalorder %s75, %s76
      %p87 = scmp.eq.s32.totalorder %s20, 0
      %p88 = por %p86, %p87
      %p89 = scmp.ne.s32.totalorder %s75, %s76
      %p90 = scmp.eq.s32.totalorder %s21, 1
      %p91 = por %p89, %p90
      %p93 = scmp.ne.s32.totalorder %s76, %s92
      %p94 = scmp.eq.s32.totalorder %s21, 0
      %p95 = por %p93, %p94
      %p96 = scmp.le.s32.totalorder 1, %s15
      %p97 = scmp.lt.s32.totalorder %s15, 3
      %p98 = pnand %p96, %p97
      %p99 = pneg %p98
      // Predicated region
      $region9: #{tpu_custom_call.1} parent=5 // pred_check
        _
      $region10: #{tpu_custom_call.1} parent=5 // pred_check_branch
        %101 = sbr.rel (%p98) target = $region12
      $region11: #{tpu_custom_call.1} parent=5 // pred_region
        %s102 = ssub.s32 %s15, 1
        // Predicated region
        $region13: #{tpu_custom_call.1} parent=11 // pred_check
          %p103 = pneg %p62
        $region14: #{tpu_custom_call.1} parent=11 // pred_check_branch
          %105 = sbr.rel (%p103) target = $region16
        $region15: #{tpu_custom_call.1} parent=11 // pred_region
          %s107 = ssub.s32 128, 128
          %108 = vsyncadd [#allocation6], %s107
          %s110 = sshll.u32 [#allocation5], 4
          %s111 = int_to_ptr.vmem [resolvable:$true] %s110
          %113 = dma.hbm_to_vmem [thread:$0]  %s1, 128, %s111, [#allocation6]
        $region16: #{tpu_custom_call.1} parent=11 // pred_fallthru
          _
      $region12: #{tpu_custom_call.1} parent=5 // pred_fallthru
        _
      %p114 = scmp.lt.s32.totalorder %s15, 2
      // Predicated region
      $region17: #{tpu_custom_call.1} parent=5 // pred_check
        %p115 = pneg %p114
      $region18: #{tpu_custom_call.1} parent=5 // pred_check_branch
        %117 = sbr.rel (%p115) target = $region20
      $region19: #{tpu_custom_call.1} parent=5 // pred_region
        // Predicated region
        $region21: #{tpu_custom_call.1} parent=19 // pred_check
          %p118 = pneg %p35
        $region22: #{tpu_custom_call.1} parent=19 // pred_check_branch
          %120 = sbr.rel (%p118) target = $region24
        $region23: #{tpu_custom_call.1} parent=19 // pred_region
          %s121 = sand.u32 %s25, 1
          %s122 = scalar_lea.sflag [#allocation3], %s121
          %s123 = sand.u32 %s25, 1
          %s124 = smul.addr %s123, 8
          %s125 = scalar_lea.vmem [#allocation2], %s124
          %s127 = ssub.s32 128, 128
          %128 = vsyncadd %s122, %s127
          %s129 = smul.addr %s15, 128
          %s130 = scalar_lea.hbm %s0, %s129
          %s132 = sshll.u32 %s125, 4
          %s133 = int_to_ptr.vmem [resolvable:$true] %s132
          %135 = dma.hbm_to_vmem [thread:$0]  %s130, 128, %s133, %s122
        $region24: #{tpu_custom_call.1} parent=19 // pred_fallthru
          _
      $region20: #{tpu_custom_call.1} parent=5 // pred_fallthru
        _
      %p136 = scmp.le.s32.totalorder 1, %s15
      %p137 = scmp.lt.s32.totalorder %s15, 3
      %p138 = pnand %p136, %p137
      %p139 = pneg %p138
      // Predicated region
      $region25: #{tpu_custom_call.1} parent=5 // pred_check
        _
      $region26: #{tpu_custom_call.1} parent=5 // pred_check_branch
        %141 = sbr.rel (%p138) target = $region28
      $region27: #{tpu_custom_call.1} parent=5 // pred_region
        %s142 = ssub.s32 %s15, 1
        %s143 = sand.u32 %s28, 1
        %s144 = scalar_lea.sflag [#allocation3], %s143
        %s145 = sand.u32 %s28, 1
        %s146 = smul.addr %s145, 8
        %s147 = scalar_lea.vmem [#allocation2], %s146
        // Predicated region
        $region29: #{tpu_custom_call.1} parent=27 // pred_check
          %p148 = pneg %p41
        $region30: #{tpu_custom_call.1} parent=27 // pred_check_branch
          %150 = sbr.rel (%p148) target = $region32
        $region31: #{tpu_custom_call.1} parent=27 // pred_region
          %151 = dma.done %s144, 128
        $region32: #{tpu_custom_call.1} parent=27 // pred_fallthru
          _
        // Predicated region
        $region33: #{tpu_custom_call.1} parent=27 // pred_check
          %p152 = pneg %p62
        $region34: #{tpu_custom_call.1} parent=27 // pred_check_branch
          %154 = sbr.rel (%p152) target = $region36
        $region35: #{tpu_custom_call.1} parent=27 // pred_region
          %155 = dma.done [#allocation6], 128
        $region36: #{tpu_custom_call.1} parent=27 // pred_fallthru
          _
        %s156 = sand.u32 %s28, 1
        %s157 = scalar_lea.sflag [#allocation3], %s156
        %s158 = sand.u32 %s28, 1
        %s159 = smul.addr %s158, 8
        %s160 = scalar_lea.vmem [#allocation2], %s159
        %p161 = pneg %p41
        %p162 = pneg %p38
        %p163 = pneg %p62
        %p164 = pneg %p59
        %p165 = pneg %p88
        %p166 = pneg %p85
        %s167 = sand.u32 %s75, 1
        %s168 = scalar_lea.sflag [#allocation4], %s167
        %s169 = sand.u32 %s75, 1
        %s170 = smul.addr %s169, 8
        %s171 = scalar_lea.vmem [#allocation7], %s170
        %v172 = vld [vmem:[%s147] sm:$0xff]
        %v173 = vld [vmem:[#allocation5] sm:$0xff]
        %v174 = vadd.f32 %v172, %v173
        %175 = vst [vmem:[%s171] sm:$0xff] %v174
        %s176 = sand.u32 %s75, 1
        %s177 = scalar_lea.sflag [#allocation4], %s176
        %s178 = sand.u32 %s75, 1
        %s179 = smul.addr %s178, 8
        %s180 = scalar_lea.vmem [#allocation7], %s179
        // Predicated region
        $region37: #{tpu_custom_call.1} parent=27 // pred_check
          %p181 = pneg %p85
        $region38: #{tpu_custom_call.1} parent=27 // pred_check_branch
          %183 = sbr.rel (%p181) target = $region40
        $region39: #{tpu_custom_call.1} parent=27 // pred_region
          %s185 = ssub.s32 128, 128
          %186 = vsyncadd %s177, %s185
          %s187 = smul.addr %s20, 128
          %s188 = scalar_lea.hbm %s2, %s187
          %s190 = sshll.u32 %s180, 4
          %s191 = int_to_ptr.vmem [resolvable:$true] %s190
          %193 = dma.vmem_to_hbm [thread:$0]  %s191, 128, %s188, %s177
        $region40: #{tpu_custom_call.1} parent=27 // pred_fallthru
          _
      $region28: #{tpu_custom_call.1} parent=5 // pred_fallthru
        _
      %p194 = scmp.le.s32.totalorder 2, %s15
      // Predicated region
      $region41: #{tpu_custom_call.1} parent=5 // pred_check
        %p195 = pneg %p194
      $region42: #{tpu_custom_call.1} parent=5 // pred_check_branch
        %197 = sbr.rel (%p195) target = $region44
      $region43: #{tpu_custom_call.1} parent=5 // pred_region
        %s198 = ssub.s32 %s15, 2
        // Predicated region
        $region45: #{tpu_custom_call.1} parent=43 // pred_check
          %p199 = pneg %p91
        $region46: #{tpu_custom_call.1} parent=43 // pred_check_branch
          %201 = sbr.rel (%p199) target = $region48
        $region47: #{tpu_custom_call.1} parent=43 // pred_region
          %s202 = sand.u32 %s76, 1
          %s203 = scalar_lea.sflag [#allocation4], %s202
          %s204 = sand.u32 %s76, 1
          %s205 = smul.addr %s204, 8
          %s206 = scalar_lea.vmem [#allocation7], %s205
          %207 = dma.done %s203, 128
        $region48: #{tpu_custom_call.1} parent=43 // pred_fallthru
          _
      $region44: #{tpu_custom_call.1} parent=5 // pred_fallthru
        _
    $region6: #{tpu_custom_call.1} parent=1 // loop_footer
      %s19 = sadd.s32 1, %s15
    $region7: #{tpu_custom_call.1} parent=1 // loop_footer_branch
      %14 = sbr.rel target = $region3
    $region8: #{tpu_custom_call.1} parent=1 // loop_exit
      _
    %208 = vsyncpa [#allocation3], 1
    %s209 = scalar_lea.sflag [#allocation3], 1
    %210 = vsyncpa %s209, 1
    %211 = vsyncpa [#allocation6], 1
    %212 = vsyncpa [#allocation4], 1
    %s213 = scalar_lea.sflag [#allocation4], 1
    %214 = vsyncpa %s213, 1

// kernel: tpu_custom_call.1
$region0: #{tpu_custom_call.1}
  #allocation0 [shape = 'u32[]', space=smem, size = 0x4, offset = 0x4, fixed_abs, tag = 'smem constant byte address 0x4 - core index']
  #allocation1 [shape = 'u32[144,128]{1,0:T(1,128)}', space=vmem, size = 0x12000, scoped, tag = 'internal scratch']
  %s0 = inlined_call_operand.hbm [shape: f32[200,128], index: 0, kind: input, shape index: {}]
  %s1 = inlined_call_operand.hbm [shape: f32[128,128], index: 1, kind: input, shape index: {}]
  %s2 = inlined_call_operand.hbm [shape: f32[1,128], index: 2, kind: input, shape index: {}]
  %s3 = inlined_call_operand.hbm [shape: f32[128,128], index: 3, kind: input, shape index: {}]
  %s4 = inlined_call_operand.hbm [shape: f32[1,128], index: 4, kind: input, shape index: {}]
  %s5 = inlined_call_operand.hbm [shape: f32[128,128], index: 5, kind: input, shape index: {}]
  %s6 = inlined_call_operand.hbm [shape: f32[1,128], index: 6, kind: input, shape index: {}]
  %s7 = inlined_call_operand.hbm [shape: f32[200,128], index: 7, kind: output, shape index: {}]
  %s8 = sld [smem:[#allocation0]]
  $region66: #{tpu_custom_call.1} parent=0
    _
  %s10 = ssub.s32 1, %s8
  %s11 = scalar_select 0, %s10, %s8
  $region1: #{tpu_custom_call.1} parent=0
    #allocation2 [shape = 'u8[102400]{0}', space=vmem, size = 0x19000, scoped, tag = 'input window, operand 0, single buffered']
    #allocation3 [shape = 's32[1]{0}', space=sflag, size = 0x4, scoped, tag = 'scoped memory for tpu_custom_call.1']
    #allocation4 [shape = 's32[1]{0}', space=sflag, size = 0x4, scoped, tag = 'scoped memory for tpu_custom_call.1']
    #allocation5 [shape = 'u8[65536]{0}', space=vmem, size = 0x10000, scoped, tag = 'input window, operand 1, single buffered']
    #allocation6 [shape = 's32[1]{0}', space=sflag, size = 0x4, scoped, tag = 'scoped memory for tpu_custom_call.1']
    #allocation7 [shape = 'u8[512]{0}', space=vmem, size = 0x400, scoped, tag = 'input window, operand 2, single buffered']
    #allocation8 [shape = 'u8[65536]{0}', space=vmem, size = 0x10000, scoped, tag = 'input window, operand 3, single buffered']
    #allocation9 [shape = 's32[1]{0}', space=sflag, size = 0x4, scoped, tag = 'scoped memory for tpu_custom_call.1']
    #allocation10 [shape = 'u8[512]{0}', space=vmem, size = 0x400, scoped, tag = 'input window, operand 4, single buffered']
    #allocation11 [shape = 'u8[65536]{0}', space=vmem, size = 0x10000, scoped, tag = 'input window, operand 5, single buffered']
    #allocation12 [shape = 's32[1]{0}', space=sflag, size = 0x4, scoped, tag = 'scoped memory for tpu_custom_call.1']
    #allocation13 [shape = 'u8[512]{0}', space=vmem, size = 0x400, scoped, tag = 'input window, operand 6, single buffered']
    #allocation14 [shape = 'u8[102400]{0}', space=vmem, size = 0x19000, scoped, tag = 'output window, operand 0, single buffered']
    %12 = vsyncpa [#allocation3], 0
    %13 = vsyncpa [#allocation6], 0
    %14 = vsyncpa [#allocation9], 0
    %15 = vsyncpa [#allocation12], 0
    %16 = vsyncpa [#allocation4], 0
    // Predicated region
    $region2: #{tpu_custom_call.1} parent=1 // pred_check
      _
    $region3: #{tpu_custom_call.1} parent=1 // pred_check_branch
      %18 = sbr.rel (0) target = $region5
    $region4: #{tpu_custom_call.1} parent=1 // pred_region
      %s20 = ssub.s32 3200, 3200
      %21 = vsyncadd [#allocation3], %s20
      %s22 = sshll.u32 [#allocation2], 4
      %s23 = int_to_ptr.vmem [resolvable:$true] %s22
      %28 = dma.hbm_to_vmem [thread:$0]  %s0, 3200, %s23, [#allocation3], 128, 128, 8
    $region5: #{tpu_custom_call.1} parent=1 // pred_fallthru
      _
    // Predicated region
    $region6: #{tpu_custom_call.1} parent=1 // pred_check
      _
    $region7: #{tpu_custom_call.1} parent=1 // pred_check_branch
      %30 = sbr.rel (0) target = $region9
    $region8: #{tpu_custom_call.1} parent=1 // pred_region
      %s32 = ssub.s32 2048, 2048
      %33 = vsyncadd [#allocation6], %s32
      %s34 = sshll.u32 [#allocation5], 4
      %s35 = int_to_ptr.vmem [resolvable:$true] %s34
      %40 = dma.hbm_to_vmem [thread:$0]  %s1, 2048, %s35, [#allocation6], 128, 128, 8
    $region9: #{tpu_custom_call.1} parent=1 // pred_fallthru
      _
    // Predicated region
    $region10: #{tpu_custom_call.1} parent=1 // pred_check
      _
    $region11: #{tpu_custom_call.1} parent=1 // pred_check_branch
      %42 = sbr.rel (0) target = $region13
    $region12: #{tpu_custom_call.1} parent=1 // pred_region
      %s44 = ssub.s32 16, 16
      %45 = vsyncadd [#allocation6], %s44
      %s47 = sshll.u32 [#allocation7], 4
      %s48 = int_to_ptr.vmem [resolvable:$true] %s47
      %50 = dma.hbm_to_vmem [thread:$0]  %s2, 16, %s48, [#allocation6]
    $region13: #{tpu_custom_call.1} parent=1 // pred_fallthru
      _
    // Predicated region
    $region14: #{tpu_custom_call.1} parent=1 // pred_check
      _
    $region15: #{tpu_custom_call.1} parent=1 // pred_check_branch
      %52 = sbr.rel (0) target = $region17
    $region16: #{tpu_custom_call.1} parent=1 // pred_region
      %s54 = ssub.s32 2048, 2048
      %55 = vsyncadd [#allocation9], %s54
      %s56 = sshll.u32 [#allocation8], 4
      %s57 = int_to_ptr.vmem [resolvable:$true] %s56
      %62 = dma.hbm_to_vmem [thread:$0]  %s3, 2048, %s57, [#allocation9], 128, 128, 8
    $region17: #{tpu_custom_call.1} parent=1 // pred_fallthru
      _
    // Predicated region
    $region18: #{tpu_custom_call.1} parent=1 // pred_check
      _
    $region19: #{tpu_custom_call.1} parent=1 // pred_check_branch
      %64 = sbr.rel (0) target = $region21
    $region20: #{tpu_custom_call.1} parent=1 // pred_region
      %s66 = ssub.s32 16, 16
      %67 = vsyncadd [#allocation9], %s66
      %s69 = sshll.u32 [#allocation10], 4
      %s70 = int_to_ptr.vmem [resolvable:$true] %s69
      %72 = dma.hbm_to_vmem [thread:$0]  %s4, 16, %s70, [#allocation9]
    $region21: #{tpu_custom_call.1} parent=1 // pred_fallthru
      _
    // Predicated region
    $region22: #{tpu_custom_call.1} parent=1 // pred_check
      _
    $region23: #{tpu_custom_call.1} parent=1 // pred_check_branch
      %74 = sbr.rel (0) target = $region25
    $region24: #{tpu_custom_call.1} parent=1 // pred_region
      %s76 = ssub.s32 2048, 2048
      %77 = vsyncadd [#allocation12], %s76
      %s78 = sshll.u32 [#allocation11], 4
      %s79 = int_to_ptr.vmem [resolvable:$true] %s78
      %84 = dma.hbm_to_vmem [thread:$0]  %s5, 2048, %s79, [#allocation12], 128, 128, 8
    $region25: #{tpu_custom_call.1} parent=1 // pred_fallthru
      _
    // Predicated region
    $region26: #{tpu_custom_call.1} parent=1 // pred_check
      _
    $region27: #{tpu_custom_call.1} parent=1 // pred_check_branch
      %86 = sbr.rel (0) target = $region29
    $region28: #{tpu_custom_call.1} parent=1 // pred_region
      %s88 = ssub.s32 16, 16
      %89 = vsyncadd [#allocation12], %s88
      %s91 = sshll.u32 [#allocation13], 4
      %s92 = int_to_ptr.vmem [resolvable:$true] %s91
      %94 = dma.hbm_to_vmem [thread:$0]  %s6, 16, %s92, [#allocation12]
    $region29: #{tpu_custom_call.1} parent=1 // pred_fallthru
      _
    // Predicated region
    $region30: #{tpu_custom_call.1} parent=1 // pred_check
      _
    $region31: #{tpu_custom_call.1} parent=1 // pred_check_branch
      %96 = sbr.rel (0) target = $region33
    $region32: #{tpu_custom_call.1} parent=1 // pred_region
      %97 = dma.done [#allocation3], 3200
    $region33: #{tpu_custom_call.1} parent=1 // pred_fallthru
      _
    // Predicated region
    $region34: #{tpu_custom_call.1} parent=1 // pred_check
      _
    $region35: #{tpu_custom_call.1} parent=1 // pred_check_branch
      %99 = sbr.rel (0) target = $region37
    $region36: #{tpu_custom_call.1} parent=1 // pred_region
      %100 = dma.done [#allocation6], 2048
    $region37: #{tpu_custom_call.1} parent=1 // pred_fallthru
      _
    // Predicated region
    $region38: #{tpu_custom_call.1} parent=1 // pred_check
      _
    $region39: #{tpu_custom_call.1} parent=1 // pred_check_branch
      %102 = sbr.rel (0) target = $region41
    $region40: #{tpu_custom_call.1} parent=1 // pred_region
      %103 = dma.done [#allocation6], 16
    $region41: #{tpu_custom_call.1} parent=1 // pred_fallthru
      _
    // Predicated region
    $region42: #{tpu_custom_call.1} parent=1 // pred_check
      _
    $region43: #{tpu_custom_call.1} parent=1 // pred_check_branch
      %105 = sbr.rel (0) target = $region45
    $region44: #{tpu_custom_call.1} parent=1 // pred_region
      %106 = dma.done [#allocation9], 2048
    $region45: #{tpu_custom_call.1} parent=1 // pred_fallthru
      _
    // Predicated region
    $region46: #{tpu_custom_call.1} parent=1 // pred_check
      _
    $region47: #{tpu_custom_call.1} parent=1 // pred_check_branch
      %108 = sbr.rel (0) target = $region49
    $region48: #{tpu_custom_call.1} parent=1 // pred_region
      %109 = dma.done [#allocation9], 16
    $region49: #{tpu_custom_call.1} parent=1 // pred_fallthru
      _
    // Predicated region
    $region50: #{tpu_custom_call.1} parent=1 // pred_check
      _
    $region51: #{tpu_custom_call.1} parent=1 // pred_check_branch
      %111 = sbr.rel (0) target = $region53
    $region52: #{tpu_custom_call.1} parent=1 // pred_region
      %112 = dma.done [#allocation12], 2048
    $region53: #{tpu_custom_call.1} parent=1 // pred_fallthru
      _
    // Predicated region
    $region54: #{tpu_custom_call.1} parent=1 // pred_check
      _
    $region55: #{tpu_custom_call.1} parent=1 // pred_check_branch
      %114 = sbr.rel (0) target = $region57
    $region56: #{tpu_custom_call.1} parent=1 // pred_region
      %115 = dma.done [#allocation12], 16
    $region57: #{tpu_custom_call.1} parent=1 // pred_fallthru
      _
    %v116 = vld [vmem:[#allocation2] sm:$0xff]
    %v117 = vld [vmem:[#allocation2 + $0x8] sm:$0xff]
    %v118 = vld [vmem:[#allocation2 + $0x10] sm:$0xff]
    %v119 = vld [vmem:[#allocation2 + $0x18] sm:$0xff]
    %v120 = vld [vmem:[#allocation2 + $0x20] sm:$0xff]
    %v121 = vld [vmem:[#allocation2 + $0x28] sm:$0xff]
    %v122 = vld [vmem:[#allocation2 + $0x30] sm:$0xff]
    %v123 = vld [vmem:[#allocation2 + $0x38] sm:$0xff]
    %v124 = vld [vmem:[#allocation2 + $0x40] sm:$0xff]
    %v125 = vld [vmem:[#allocation2 + $0x48] sm:$0xff]
    %v126 = vld [vmem:[#allocation2 + $0x50] sm:$0xff]
    %v127 = vld [vmem:[#allocation2 + $0x58] sm:$0xff]
    %v128 = vld [vmem:[#allocation2 + $0x60] sm:$0xff]
    %v129 = vld [vmem:[#allocation2 + $0x68] sm:$0xff]
    %v130 = vld [vmem:[#allocation2 + $0x70] sm:$0xff]
    %v131 = vld [vmem:[#allocation2 + $0x78] sm:$0xff]
    %v132 = vld [vmem:[#allocation2 + $0x80] sm:$0xff]
    %v133 = vld [vmem:[#allocation2 + $0x88] sm:$0xff]
    %v134 = vld [vmem:[#allocation2 + $0x90] sm:$0xff]
    %v135 = vld [vmem:[#allocation2 + $0x98] sm:$0xff]
    %v136 = vld [vmem:[#allocation2 + $0xa0] sm:$0xff]
    %v137 = vld [vmem:[#allocation2 + $0xa8] sm:$0xff]
    %v138 = vld [vmem:[#allocation2 + $0xb0] sm:$0xff]
    %v139 = vld [vmem:[#allocation2 + $0xb8] sm:$0xff]
    %v140 = vld [vmem:[#allocation2 + $0xc0] sm:$0xff]
    %v141 = vld [vmem:[#allocation5] sm:$0xff]
    %v142 = vld [vmem:[#allocation5 + $0x8] sm:$0xff]
    %v143 = vld [vmem:[#allocation5 + $0x10] sm:$0xff]
    %v144 = vld [vmem:[#allocation5 + $0x18] sm:$0xff]
    %v145 = vld [vmem:[#allocation5 + $0x20] sm:$0xff]
    %v146 = vld [vmem:[#allocation5 + $0x28] sm:$0xff]
    %v147 = vld [vmem:[#allocation5 + $0x30] sm:$0xff]
    %v148 = vld [vmem:[#allocation5 + $0x38] sm:$0xff]
    %v149 = vld [vmem:[#allocation5 + $0x40] sm:$0xff]
    %v150 = vld [vmem:[#allocation5 + $0x48] sm:$0xff]
    %v151 = vld [vmem:[#allocation5 + $0x50] sm:$0xff]
    %v152 = vld [vmem:[#allocation5 + $0x58] sm:$0xff]
    %v153 = vld [vmem:[#allocation5 + $0x60] sm:$0xff]
    %v154 = vld [vmem:[#allocation5 + $0x68] sm:$0xff]
    %v155 = vld [vmem:[#allocation5 + $0x70] sm:$0xff]
    %v156 = vld [vmem:[#allocation5 + $0x78] sm:$0xff]
    %v157 = vld [vmem:[#allocation7] sm:$0x1]
    %v159 = vlaneseq
    %v160 = vshrl.u32 %v159, 7
    %v161 = vsub.s32 0, %v160
    %v162 = vrot.slane %v157, %v161
    %164 = vmatprep.subr.mxu0 0.0
    %165 = vmatpush1.msra.mxu0 %v141
    %166 = vmatprep.subr.mxu0 0.0
    %167 = vmatpush1.msra.mxu0 %v142
    %168 = vmatprep.subr.mxu0 0.0
    %169 = vmatpush1.msra.mxu0 %v143
    %170 = vmatprep.subr.mxu0 0.0
    %171 = vmatpush1.msra.mxu0 %v144
    %172 = vmatprep.subr.mxu0 0.0
    %173 = vmatpush1.msra.mxu0 %v145
    %174 = vmatprep.subr.mxu0 0.0
    %175 = vmatpush1.msra.mxu0 %v146
    %176 = vmatprep.subr.mxu0 0.0
    %177 = vmatpush1.msra.mxu0 %v147
    %178 = vmatprep.subr.mxu0 0.0
    %179 = vmatpush1.msra.mxu0 %v148
    %180 = vmatprep.subr.mxu0 0.0
    %181 = vmatpush1.msra.mxu0 %v149
    %182 = vmatprep.subr.mxu0 0.0
    %183 = vmatpush1.msra.mxu0 %v150
    %184 = vmatprep.subr.mxu0 0.0
    %185 = vmatpush1.msra.mxu0 %v151
    %186 = vmatprep.subr.mxu0 0.0
    %187 = vmatpush1.msra.mxu0 %v152
    %188 = vmatprep.subr.mxu0 0.0
    %189 = vmatpush1.msra.mxu0 %v153
    %190 = vmatprep.subr.mxu0 0.0
    %191 = vmatpush1.msra.mxu0 %v154
    %192 = vmatprep.subr.mxu0 0.0
    %193 = vmatpush1.msra.mxu0 %v155
    %194 = vmatprep.subr.mxu0 0.0
    %195 = vmatpush1.msra.mxu0 %v156
    %196 = vmatprep.subr.mxu0 0.0
    %197 = vmatpush1.msra.mxu0 0.0
    %198 = vmatprep.subr.mxu0 0.0
    %199 = vmatpush1.msra.mxu0 0.0
    %200 = vmatprep.subr.mxu0 0.0
    %201 = vmatpush1.msra.mxu0 0.0
    %202 = vmatprep.subr.mxu0 0.0
    %203 = vmatpush1.msra.mxu0 0.0
    %204 = vmatprep.subr.mxu0 0.0
    %205 = vmatpush1.msra.mxu0 0.0
    %206 = vmatprep.subr.mxu0 0.0
    %207 = vmatpush1.msra.mxu0 0.0
    %208 = vmatprep.subr.mxu0 0.0
    %209 = vmatpush1.msra.mxu0 0.0
    %210 = vmatprep.subr.mxu0 0.0
    %211 = vmatpush1.msra.mxu0 0.0
    %212 = vmatprep.subr.mxu0 0.0
    %213 = vmatpush1.msra.mxu0 0.0
    %214 = vmatprep.subr.mxu0 0.0
    %215 = vmatpush1.msra.mxu0 0.0
    %216 = vmatprep.subr.mxu0 0.0
    %217 = vmatpush1.msra.mxu0 0.0
    %218 = vmatprep.subr.mxu0 0.0
    %219 = vmatpush1.msra.mxu0 0.0
    %220 = vmatprep.subr.mxu0 0.0
    %221 = vmatpush1.msra.mxu0 0.0
    %222 = vmatprep.subr.mxu0 0.0
    %223 = vmatpush1.msra.mxu0 0.0
    %224 = vmatprep.subr.mxu0 0.0
    %225 = vmatpush1.msra.mxu0 0.0
    %226 = vmatprep.subr.mxu0 0.0
    %227 = vmatpush1.msra.mxu0 0.0
    %228 = vmatprep.mubr.f32.mxu0 0.0
    %229 = vmatmul.mubr.f32.gmra.mrb[0].mxu0 %v116
    %v230 = vpop.f32.mrb[0].mxu0
    %v231 = vadd.f32 %v162, %v230
    %v232 = vpop.f32.mrb[0].mxu0
    %233 = vmatprep.mubr.f32.mxu0 0.0
    %234 = vmatmul.mubr.f32.gmra.mrb[0].mxu0 %v117
    %v235 = vpop.f32.mrb[0].mxu0
    %v236 = vadd.f32 %v162, %v235
    %v237 = vpop.f32.mrb[0].mxu0
    %238 = vmatprep.mubr.f32.mxu0 0.0
    %239 = vmatmul.mubr.f32.gmra.mrb[0].mxu0 %v118
    %v240 = vpop.f32.mrb[0].mxu0
    %v241 = vadd.f32 %v162, %v240
    %v242 = vpop.f32.mrb[0].mxu0
    %243 = vmatprep.mubr.f32.mxu0 0.0
    %244 = vmatmul.mubr.f32.gmra.mrb[0].mxu0 %v119
    %v245 = vpop.f32.mrb[0].mxu0
    %v246 = vadd.f32 %v162, %v245
    %v247 = vpop.f32.mrb[0].mxu0
    %248 = vmatprep.mubr.f32.mxu0 0.0
    %249 = vmatmul.mubr.f32.gmra.mrb[0].mxu0 %v120
    %v250 = vpop.f32.mrb[0].mxu0
    %v251 = vadd.f32 %v162, %v250
    %v252 = vpop.f32.mrb[0].mxu0
    %253 = vmatprep.mubr.f32.mxu0 0.0
    %254 = vmatmul.mubr.f32.gmra.mrb[0].mxu0 %v121
    %v255 = vpop.f32.mrb[0].mxu0
    %v256 = vadd.f32 %v162, %v255
    %v257 = vpop.f32.mrb[0].mxu0
    %258 = vmatprep.mubr.f32.mxu0 0.0
    %259 = vmatmul.mubr.f32.gmra.mrb[0].mxu0 %v122
    %v260 = vpop.f32.mrb[0].mxu0
    %v261 = vadd.f32 %v162, %v260
    %v262 = vpop.f32.mrb[0].mxu0
    %263 = vmatprep.mubr.f32.mxu0 0.0
    %264 = vmatmul.mubr.f32.gmra.mrb[0].mxu0 %v123
    %v265 = vpop.f32.mrb[0].mxu0
    %v266 = vadd.f32 %v162, %v265
    %v267 = vpop.f32.mrb[0].mxu0
    %268 = vmatprep.mubr.f32.mxu0 0.0
    %269 = vmatmul.mubr.f32.gmra.mrb[0].mxu0 %v124
    %v270 = vpop.f32.mrb[0].mxu0
    %v271 = vadd.f32 %v162, %v270
    %v272 = vpop.f32.mrb[0].mxu0
    %273 = vmatprep.mubr.f32.mxu0 0.0
    %274 = vmatmul.mubr.f32.gmra.mrb[0].mxu0 %v125
    %v275 = vpop.f32.mrb[0].mxu0
    %v276 = vadd.f32 %v162, %v275
    %v277 = vpop.f32.mrb[0].mxu0
    %278 = vmatprep.mubr.f32.mxu0 0.0
    %279 = vmatmul.mubr.f32.gmra.mrb[0].mxu0 %v126
    %v280 = vpop.f32.mrb[0].mxu0
    %v281 = vadd.f32 %v162, %v280
    %v282 = vpop.f32.mrb[0].mxu0
    %283 = vmatprep.mubr.f32.mxu0 0.0
    %284 = vmatmul.mubr.f32.gmra.mrb[0].mxu0 %v127
    %v285 = vpop.f32.mrb[0].mxu0
    %v286 = vadd.f32 %v162, %v285
    %v287 = vpop.f32.mrb[0].mxu0
    %288 = vmatprep.mubr.f32.mxu0 0.0
    %289 = vmatmul.mubr.f32.gmra.mrb[0].mxu0 %v128
    %v290 = vpop.f32.mrb[0].mxu0
    %v291 = vadd.f32 %v162, %v290
    %v292 = vpop.f32.mrb[0].mxu0
    %293 = vmatprep.mubr.f32.mxu0 0.0
    %294 = vmatmul.mubr.f32.gmra.mrb[0].mxu0 %v129
    %v295 = vpop.f32.mrb[0].mxu0
    %v296 = vadd.f32 %v162, %v295
    %v297 = vpop.f32.mrb[0].mxu0
    %298 = vmatprep.mubr.f32.mxu0 0.0
    %299 = vmatmul.mubr.f32.gmra.mrb[0].mxu0 %v130
    %v300 = vpop.f32.mrb[0].mxu0
    %v301 = vadd.f32 %v162, %v300
    %v302 = vpop.f32.mrb[0].mxu0
    %303 = vmatprep.mubr.f32.mxu0 0.0
    %304 = vmatmul.mubr.f32.gmra.mrb[0].mxu0 %v131
    %v305 = vpop.f32.mrb[0].mxu0
    %v306 = vadd.f32 %v162, %v305
    %v307 = vpop.f32.mrb[0].mxu0
    %308 = vmatprep.mubr.f32.mxu0 0.0
    %309 = vmatmul.mubr.f32.gmra.mrb[0].mxu0 %v132
    %v310 = vpop.f32.mrb[0].mxu0
    %v311 = vadd.f32 %v162, %v310
    %v312 = vpop.f32.mrb[0].mxu0
    %313 = vmatprep.mubr.f32.mxu0 0.0
    %314 = vmatmul.mubr.f32.gmra.mrb[0].mxu0 %v133
    %v315 = vpop.f32.mrb[0].mxu0
    %v316 = vadd.f32 %v162, %v315
    %v317 = vpop.f32.mrb[0].mxu0
    %318 = vmatprep.mubr.f32.mxu0 0.0
    %319 = vmatmul.mubr.f32.gmra.mrb[0].mxu0 %v134
    %v320 = vpop.f32.mrb[0].mxu0
    %v321 = vadd.f32 %v162, %v320
    %v322 = vpop.f32.mrb[0].mxu0
    %323 = vmatprep.mubr.f32.mxu0 0.0
    %324 = vmatmul.mubr.f32.gmra.mrb[0].mxu0 %v135
    %v325 = vpop.f32.mrb[0].mxu0
    %v326 = vadd.f32 %v162, %v325
    %v327 = vpop.f32.mrb[0].mxu0
    %328 = vmatprep.mubr.f32.mxu0 0.0
    %329 = vmatmul.mubr.f32.gmra.mrb[0].mxu0 %v136
    %v330 = vpop.f32.mrb[0].mxu0
    %v331 = vadd.f32 %v162, %v330
    %v332 = vpop.f32.mrb[0].mxu0
    %333 = vmatprep.mubr.f32.mxu0 0.0
    %334 = vmatmul.mubr.f32.gmra.mrb[0].mxu0 %v137
    %v335 = vpop.f32.mrb[0].mxu0
    %v336 = vadd.f32 %v162, %v335
    %v337 = vpop.f32.mrb[0].mxu0
    %338 = vmatprep.mubr.f32.mxu0 0.0
    %339 = vmatmul.mubr.f32.gmra.mrb[0].mxu0 %v138
    %v340 = vpop.f32.mrb[0].mxu0
    %v341 = vadd.f32 %v162, %v340
    %v342 = vpop.f32.mrb[0].mxu0
    %343 = vmatprep.mubr.f32.mxu0 0.0
    %344 = vmatmul.mubr.f32.gmra.mrb[0].mxu0 %v139
    %v345 = vpop.f32.mrb[0].mxu0
    %v346 = vadd.f32 %v162, %v345
    %v347 = vpop.f32.mrb[0].mxu0
    %348 = vmatprep.mubr.f32.mxu0 0.0
    %349 = vmatmul.mubr.f32.gmra.mrb[0].mxu0 %v140
    %v350 = vpop.f32.mrb[0].mxu0
    %v351 = vadd.f32 %v162, %v350
    %v352 = vpop.f32.mrb[0].mxu0
    %353 = vdwg.mxu0
    %v354 = vmax.f32 %v231, 0.0
    %v355 = vmax.f32 %v236, 0.0
    %v356 = vmax.f32 %v241, 0.0
    %v357 = vmax.f32 %v246, 0.0
    %v358 = vmax.f32 %v251, 0.0
    %v359 = vmax.f32 %v256, 0.0
    %v360 = vmax.f32 %v261, 0.0
    %v361 = vmax.f32 %v266, 0.0
    %v362 = vmax.f32 %v271, 0.0
    %v363 = vmax.f32 %v276, 0.0
    %v364 = vmax.f32 %v281, 0.0
    %v365 = vmax.f32 %v286, 0.0
    %v366 = vmax.f32 %v291, 0.0
    %v367 = vmax.f32 %v296, 0.0
    %v368 = vmax.f32 %v301, 0.0
    %v369 = vmax.f32 %v306, 0.0
    %v370 = vmax.f32 %v311, 0.0
    %v371 = vmax.f32 %v316, 0.0
    %v372 = vmax.f32 %v321, 0.0
    %v373 = vmax.f32 %v326, 0.0
    %v374 = vmax.f32 %v331, 0.0
    %v375 = vmax.f32 %v336, 0.0
    %v376 = vmax.f32 %v341, 0.0
    %v377 = vmax.f32 %v346, 0.0
    %v378 = vmax.f32 %v351, 0.0
    %v379 = vld [vmem:[#allocation8] sm:$0xff]
    %v380 = vld [vmem:[#allocation8 + $0x8] sm:$0xff]
    %v381 = vld [vmem:[#allocation8 + $0x10] sm:$0xff]
    %v382 = vld [vmem:[#allocation8 + $0x18] sm:$0xff]
    %v383 = vld [vmem:[#allocation8 + $0x20] sm:$0xff]
    %v384 = vld [vmem:[#allocation8 + $0x28] sm:$0xff]
    %v385 = vld [vmem:[#allocation8 + $0x30] sm:$0xff]
    %v386 = vld [vmem:[#allocation8 + $0x38] sm:$0xff]
    %v387 = vld [vmem:[#allocation8 + $0x40] sm:$0xff]
    %v388 = vld [vmem:[#allocation8 + $0x48] sm:$0xff]
    %v389 = vld [vmem:[#allocation8 + $0x50] sm:$0xff]
    %v390 = vld [vmem:[#allocation8 + $0x58] sm:$0xff]
    %v391 = vld [vmem:[#allocation8 + $0x60] sm:$0xff]
    %v392 = vld [vmem:[#allocation8 + $0x68] sm:$0xff]
    %v393 = vld [vmem:[#allocation8 + $0x70] sm:$0xff]
    %v394 = vld [vmem:[#allocation8 + $0x78] sm:$0xff]
    %v395 = vld [vmem:[#allocation10] sm:$0x1]
    %v397 = vlaneseq
    %v398 = vshrl.u32 %v397, 7
    %v399 = vsub.s32 0, %v398
    %v400 = vrot.slane %v395, %v399
    %402 = vmatprep.subr.mxu0 0.0
    %403 = vmatpush1.msra.mxu0 %v379
    %404 = vmatprep.subr.mxu0 0.0
    %405 = vmatpush1.msra.mxu0 %v380
    %406 = vmatprep.subr.mxu0 0.0
    %407 = vmatpush1.msra.mxu0 %v381
    %408 = vmatprep.subr.mxu0 0.0
    %409 = vmatpush1.msra.mxu0 %v382
    %410 = vmatprep.subr.mxu0 0.0
    %411 = vmatpush1.msra.mxu0 %v383
    %412 = vmatprep.subr.mxu0 0.0
    %413 = vmatpush1.msra.mxu0 %v384
    %414 = vmatprep.subr.mxu0 0.0
    %415 = vmatpush1.msra.mxu0 %v385
    %416 = vmatprep.subr.mxu0 0.0
    %417 = vmatpush1.msra.mxu0 %v386
    %418 = vmatprep.subr.mxu0 0.0
    %419 = vmatpush1.msra.mxu0 %v387
    %420 = vmatprep.subr.mxu0 0.0
    %421 = vmatpush1.msra.mxu0 %v388
    %422 = vmatprep.subr.mxu0 0.0
    %423 = vmatpush1.msra.mxu0 %v389
    %424 = vmatprep.subr.mxu0 0.0
    %425 = vmatpush1.msra.mxu0 %v390
    %426 = vmatprep.subr.mxu0 0.0
    %427 = vmatpush1.msra.mxu0 %v391
    %428 = vmatprep.subr.mxu0 0.0
    %429 = vmatpush1.msra.mxu0 %v392
    %430 = vmatprep.subr.mxu0 0.0
    %431 = vmatpush1.msra.mxu0 %v393
    %432 = vmatprep.subr.mxu0 0.0
    %433 = vmatpush1.msra.mxu0 %v394
    %434 = vmatprep.subr.mxu0 0.0
    %435 = vmatpush1.msra.mxu0 0.0
    %436 = vmatprep.subr.mxu0 0.0
    %437 = vmatpush1.msra.mxu0 0.0
    %438 = vmatprep.subr.mxu0 0.0
    %439 = vmatpush1.msra.mxu0 0.0
    %440 = vmatprep.subr.mxu0 0.0
    %441 = vmatpush1.msra.mxu0 0.0
    %442 = vmatprep.subr.mxu0 0.0
    %443 = vmatpush1.msra.mxu0 0.0
    %444 = vmatprep.subr.mxu0 0.0
    %445 = vmatpush1.msra.mxu0 0.0
    %446 = vmatprep.subr.mxu0 0.0
    %447 = vmatpush1.msra.mxu0 0.0
    %448 = vmatprep.subr.mxu0 0.0
    %449 = vmatpush1.msra.mxu0 0.0
    %450 = vmatprep.subr.mxu0 0.0
    %451 = vmatpush1.msra.mxu0 0.0
    %452 = vmatprep.subr.mxu0 0.0
    %453 = vmatpush1.msra.mxu0 0.0
    %454 = vmatprep.subr.mxu0 0.0
    %455 = vmatpush1.msra.mxu0 0.0
    %456 = vmatprep.subr.mxu0 0.0
    %457 = vmatpush1.msra.mxu0 0.0
    %458 = vmatprep.subr.mxu0 0.0
    %459 = vmatpush1.msra.mxu0 0.0
    %460 = vmatprep.subr.mxu0 0.0
    %461 = vmatpush1.msra.mxu0 0.0
    %462 = vmatprep.subr.mxu0 0.0
    %463 = vmatpush1.msra.mxu0 0.0
    %464 = vmatprep.subr.mxu0 0.0
    %465 = vmatpush1.msra.mxu0 0.0
    %466 = vmatprep.mubr.f32.mxu0 0.0
    %467 = vmatmul.mubr.f32.gmra.mrb[0].mxu0 %v354
    %v468 = vpop.f32.mrb[0].mxu0
    %v469 = vadd.f32 %v400, %v468
    %v470 = vpop.f32.mrb[0].mxu0
    %471 = vmatprep.mubr.f32.mxu0 0.0
    %472 = vmatmul.mubr.f32.gmra.mrb[0].mxu0 %v355
    %v473 = vpop.f32.mrb[0].mxu0
    %v474 = vadd.f32 %v400, %v473
    %v475 = vpop.f32.mrb[0].mxu0
    %476 = vmatprep.mubr.f32.mxu0 0.0
    %477 = vmatmul.mubr.f32.gmra.mrb[0].mxu0 %v356
    %v478 = vpop.f32.mrb[0].mxu0
    %v479 = vadd.f32 %v400, %v478
    %v480 = vpop.f32.mrb[0].mxu0
    %481 = vmatprep.mubr.f32.mxu0 0.0
    %482 = vmatmul.mubr.f32.gmra.mrb[0].mxu0 %v357
    %v483 = vpop.f32.mrb[0].mxu0
    %v484 = vadd.f32 %v400, %v483
    %v485 = vpop.f32.mrb[0].mxu0
    %486 = vmatprep.mubr.f32.mxu0 0.0
    %487 = vmatmul.mubr.f32.gmra.mrb[0].mxu0 %v358
    %v488 = vpop.f32.mrb[0].mxu0
    %v489 = vadd.f32 %v400, %v488
    %v490 = vpop.f32.mrb[0].mxu0
    %491 = vmatprep.mubr.f32.mxu0 0.0
    %492 = vmatmul.mubr.f32.gmra.mrb[0].mxu0 %v359
    %v493 = vpop.f32.mrb[0].mxu0
    %v494 = vadd.f32 %v400, %v493
    %v495 = vpop.f32.mrb[0].mxu0
    %496 = vmatprep.mubr.f32.mxu0 0.0
    %497 = vmatmul.mubr.f32.gmra.mrb[0].mxu0 %v360
    %v498 = vpop.f32.mrb[0].mxu0
    %v499 = vadd.f32 %v400, %v498
    %v500 = vpop.f32.mrb[0].mxu0
    %501 = vmatprep.mubr.f32.mxu0 0.0
    %502 = vmatmul.mubr.f32.gmra.mrb[0].mxu0 %v361
    %v503 = vpop.f32.mrb[0].mxu0
    %v504 = vadd.f32 %v400, %v503
    %v505 = vpop.f32.mrb[0].mxu0
    %506 = vmatprep.mubr.f32.mxu0 0.0
    %507 = vmatmul.mubr.f32.gmra.mrb[0].mxu0 %v362
    %v508 = vpop.f32.mrb[0].mxu0
    %v509 = vadd.f32 %v400, %v508
    %v510 = vpop.f32.mrb[0].mxu0
    %511 = vmatprep.mubr.f32.mxu0 0.0
    %512 = vmatmul.mubr.f32.gmra.mrb[0].mxu0 %v363
    %v513 = vpop.f32.mrb[0].mxu0
    %v514 = vadd.f32 %v400, %v513
    %v515 = vpop.f32.mrb[0].mxu0
    %516 = vmatprep.mubr.f32.mxu0 0.0
    %517 = vmatmul.mubr.f32.gmra.mrb[0].mxu0 %v364
    %v518 = vpop.f32.mrb[0].mxu0
    %v519 = vadd.f32 %v400, %v518
    %v520 = vpop.f32.mrb[0].mxu0
    %521 = vmatprep.mubr.f32.mxu0 0.0
    %522 = vmatmul.mubr.f32.gmra.mrb[0].mxu0 %v365
    %v523 = vpop.f32.mrb[0].mxu0
    %v524 = vadd.f32 %v400, %v523
    %v525 = vpop.f32.mrb[0].mxu0
    %526 = vmatprep.mubr.f32.mxu0 0.0
    %527 = vmatmul.mubr.f32.gmra.mrb[0].mxu0 %v366
    %v528 = vpop.f32.mrb[0].mxu0
    %v529 = vadd.f32 %v400, %v528
    %v530 = vpop.f32.mrb[0].mxu0
    %531 = vmatprep.mubr.f32.mxu0 0.0
    %532 = vmatmul.mubr.f32.gmra.mrb[0].mxu0 %v367
    %v533 = vpop.f32.mrb[0].mxu0
    %v534 = vadd.f32 %v400, %v533
    %v535 = vpop.f32.mrb[0].mxu0
    %536 = vmatprep.mubr.f32.mxu0 0.0
    %537 = vmatmul.mubr.f32.gmra.mrb[0].mxu0 %v368
    %v538 = vpop.f32.mrb[0].mxu0
    %v539 = vadd.f32 %v400, %v538
    %v540 = vpop.f32.mrb[0].mxu0
    %541 = vmatprep.mubr.f32.mxu0 0.0
    %542 = vmatmul.mubr.f32.gmra.mrb[0].mxu0 %v369
    %v543 = vpop.f32.mrb[0].mxu0
    %v544 = vadd.f32 %v400, %v543
    %v545 = vpop.f32.mrb[0].mxu0
    %546 = vmatprep.mubr.f32.mxu0 0.0
    %547 = vmatmul.mubr.f32.gmra.mrb[0].mxu0 %v370
    %v548 = vpop.f32.mrb[0].mxu0
    %v549 = vadd.f32 %v400, %v548
    %v550 = vpop.f32.mrb[0].mxu0
    %551 = vmatprep.mubr.f32.mxu0 0.0
    %552 = vmatmul.mubr.f32.gmra.mrb[0].mxu0 %v371
    %v553 = vpop.f32.mrb[0].mxu0
    %v554 = vadd.f32 %v400, %v553
    %v555 = vpop.f32.mrb[0].mxu0
    %556 = vmatprep.mubr.f32.mxu0 0.0
    %557 = vmatmul.mubr.f32.gmra.mrb[0].mxu0 %v372
    %v558 = vpop.f32.mrb[0].mxu0
    %v559 = vadd.f32 %v400, %v558
    %v560 = vpop.f32.mrb[0].mxu0
    %561 = vmatprep.mubr.f32.mxu0 0.0
    %562 = vmatmul.mubr.f32.gmra.mrb[0].mxu0 %v373
    %v563 = vpop.f32.mrb[0].mxu0
    %v564 = vadd.f32 %v400, %v563
    %v565 = vpop.f32.mrb[0].mxu0
    %566 = vmatprep.mubr.f32.mxu0 0.0
    %567 = vmatmul.mubr.f32.gmra.mrb[0].mxu0 %v374
    %v568 = vpop.f32.mrb[0].mxu0
    %v569 = vadd.f32 %v400, %v568
    %v570 = vpop.f32.mrb[0].mxu0
    %571 = vmatprep.mubr.f32.mxu0 0.0
    %572 = vmatmul.mubr.f32.gmra.mrb[0].mxu0 %v375
    %v573 = vpop.f32.mrb[0].mxu0
    %v574 = vadd.f32 %v400, %v573
    %v575 = vpop.f32.mrb[0].mxu0
    %576 = vmatprep.mubr.f32.mxu0 0.0
    %577 = vmatmul.mubr.f32.gmra.mrb[0].mxu0 %v376
    %v578 = vpop.f32.mrb[0].mxu0
    %v579 = vadd.f32 %v400, %v578
    %v580 = vpop.f32.mrb[0].mxu0
    %581 = vmatprep.mubr.f32.mxu0 0.0
    %582 = vmatmul.mubr.f32.gmra.mrb[0].mxu0 %v377
    %v583 = vpop.f32.mrb[0].mxu0
    %v584 = vadd.f32 %v400, %v583
    %v585 = vpop.f32.mrb[0].mxu0
    %586 = vmatprep.mubr.f32.mxu0 0.0
    %587 = vmatmul.mubr.f32.gmra.mrb[0].mxu0 %v378
    %v588 = vpop.f32.mrb[0].mxu0
    %v589 = vadd.f32 %v400, %v588
    %v590 = vpop.f32.mrb[0].mxu0
    %591 = vdwg.mxu0
    %v592 = vmax.f32 %v469, 0.0
    %v593 = vmax.f32 %v474, 0.0
    %v594 = vmax.f32 %v479, 0.0
    %v595 = vmax.f32 %v484, 0.0
    %v596 = vmax.f32 %v489, 0.0
    %v597 = vmax.f32 %v494, 0.0
    %v598 = vmax.f32 %v499, 0.0
    %v599 = vmax.f32 %v504, 0.0
    %v600 = vmax.f32 %v509, 0.0
    %v601 = vmax.f32 %v514, 0.0
    %v602 = vmax.f32 %v519, 0.0
    %v603 = vmax.f32 %v524, 0.0
    %v604 = vmax.f32 %v529, 0.0
    %v605 = vmax.f32 %v534, 0.0
    %v606 = vmax.f32 %v539, 0.0
    %v607 = vmax.f32 %v544, 0.0
    %v608 = vmax.f32 %v549, 0.0
    %v609 = vmax.f32 %v554, 0.0
    %v610 = vmax.f32 %v559, 0.0
    %v611 = vmax.f32 %v564, 0.0
    %v612 = vmax.f32 %v569, 0.0
    %v613 = vmax.f32 %v574, 0.0
    %v614 = vmax.f32 %v579, 0.0
    %v615 = vmax.f32 %v584, 0.0
    %v616 = vmax.f32 %v589, 0.0
    %v617 = vld [vmem:[#allocation11] sm:$0xff]
    %v618 = vld [vmem:[#allocation11 + $0x8] sm:$0xff]
    %v619 = vld [vmem:[#allocation11 + $0x10] sm:$0xff]
    %v620 = vld [vmem:[#allocation11 + $0x18] sm:$0xff]
    %v621 = vld [vmem:[#allocation11 + $0x20] sm:$0xff]
    %v622 = vld [vmem:[#allocation11 + $0x28] sm:$0xff]
    %v623 = vld [vmem:[#allocation11 + $0x30] sm:$0xff]
    %v624 = vld [vmem:[#allocation11 + $0x38] sm:$0xff]
    %v625 = vld [vmem:[#allocation11 + $0x40] sm:$0xff]
    %v626 = vld [vmem:[#allocation11 + $0x48] sm:$0xff]
    %v627 = vld [vmem:[#allocation11 + $0x50] sm:$0xff]
    %v628 = vld [vmem:[#allocation11 + $0x58] sm:$0xff]
    %v629 = vld [vmem:[#allocation11 + $0x60] sm:$0xff]
    %v630 = vld [vmem:[#allocation11 + $0x68] sm:$0xff]
    %v631 = vld [vmem:[#allocation11 + $0x70] sm:$0xff]
    %v632 = vld [vmem:[#allocation11 + $0x78] sm:$0xff]
    %v633 = vld [vmem:[#allocation13] sm:$0x1]
    %v635 = vlaneseq
    %v636 = vshrl.u32 %v635, 7
    %v637 = vsub.s32 0, %v636
    %v638 = vrot.slane %v633, %v637
    %640 = vmatprep.subr.mxu0 0.0
    %641 = vmatpush1.msra.mxu0 %v617
    %642 = vmatprep.subr.mxu0 0.0
    %643 = vmatpush1.msra.mxu0 %v618
    %644 = vmatprep.subr.mxu0 0.0
    %645 = vmatpush1.msra.mxu0 %v619
    %646 = vmatprep.subr.mxu0 0.0
    %647 = vmatpush1.msra.mxu0 %v620
    %648 = vmatprep.subr.mxu0 0.0
    %649 = vmatpush1.msra.mxu0 %v621
    %650 = vmatprep.subr.mxu0 0.0
    %651 = vmatpush1.msra.mxu0 %v622
    %652 = vmatprep.subr.mxu0 0.0
    %653 = vmatpush1.msra.mxu0 %v623
    %654 = vmatprep.subr.mxu0 0.0
    %655 = vmatpush1.msra.mxu0 %v624
    %656 = vmatprep.subr.mxu0 0.0
    %657 = vmatpush1.msra.mxu0 %v625
    %658 = vmatprep.subr.mxu0 0.0
    %659 = vmatpush1.msra.mxu0 %v626
    %660 = vmatprep.subr.mxu0 0.0
    %661 = vmatpush1.msra.mxu0 %v627
    %662 = vmatprep.subr.mxu0 0.0
    %663 = vmatpush1.msra.mxu0 %v628
    %664 = vmatprep.subr.mxu0 0.0
    %665 = vmatpush1.msra.mxu0 %v629
    %666 = vmatprep.subr.mxu0 0.0
    %667 = vmatpush1.msra.mxu0 %v630
    %668 = vmatprep.subr.mxu0 0.0
    %669 = vmatpush1.msra.mxu0 %v631
    %670 = vmatprep.subr.mxu0 0.0
    %671 = vmatpush1.msra.mxu0 %v632
    %672 = vmatprep.subr.mxu0 0.0
    %673 = vmatpush1.msra.mxu0 0.0
    %674 = vmatprep.subr.mxu0 0.0
    %675 = vmatpush1.msra.mxu0 0.0
    %676 = vmatprep.subr.mxu0 0.0
    %677 = vmatpush1.msra.mxu0 0.0
    %678 = vmatprep.subr.mxu0 0.0
    %679 = vmatpush1.msra.mxu0 0.0
    %680 = vmatprep.subr.mxu0 0.0
    %681 = vmatpush1.msra.mxu0 0.0
    %682 = vmatprep.subr.mxu0 0.0
    %683 = vmatpush1.msra.mxu0 0.0
    %684 = vmatprep.subr.mxu0 0.0
    %685 = vmatpush1.msra.mxu0 0.0
    %686 = vmatprep.subr.mxu0 0.0
    %687 = vmatpush1.msra.mxu0 0.0
    %688 = vmatprep.subr.mxu0 0.0
    %689 = vmatpush1.msra.mxu0 0.0
    %690 = vmatprep.subr.mxu0 0.0
    %691 = vmatpush1.msra.mxu0 0.0
    %692 = vmatprep.subr.mxu0 0.0
    %693 = vmatpush1.msra.mxu0 0.0
    %694 = vmatprep.subr.mxu0 0.0
    %695 = vmatpush1.msra.mxu0 0.0
    %696 = vmatprep.subr.mxu0 0.0
    %697 = vmatpush1.msra.mxu0 0.0
    %698 = vmatprep.subr.mxu0 0.0
    %699 = vmatpush1.msra.mxu0 0.0
    %700 = vmatprep.subr.mxu0 0.0
    %701 = vmatpush1.msra.mxu0 0.0
    %702 = vmatprep.subr.mxu0 0.0
    %703 = vmatpush1.msra.mxu0 0.0
    %704 = vmatprep.mubr.f32.mxu0 0.0
    %705 = vmatmul.mubr.f32.gmra.mrb[0].mxu0 %v592
    %v706 = vpop.f32.mrb[0].mxu0
    %v707 = vadd.f32 %v638, %v706
    %v708 = vpop.f32.mrb[0].mxu0
    %709 = vmatprep.mubr.f32.mxu0 0.0
    %710 = vmatmul.mubr.f32.gmra.mrb[0].mxu0 %v593
    %v711 = vpop.f32.mrb[0].mxu0
    %v712 = vadd.f32 %v638, %v711
    %v713 = vpop.f32.mrb[0].mxu0
    %714 = vmatprep.mubr.f32.mxu0 0.0
    %715 = vmatmul.mubr.f32.gmra.mrb[0].mxu0 %v594
    %v716 = vpop.f32.mrb[0].mxu0
    %v717 = vadd.f32 %v638, %v716
    %v718 = vpop.f32.mrb[0].mxu0
    %719 = vmatprep.mubr.f32.mxu0 0.0
    %720 = vmatmul.mubr.f32.gmra.mrb[0].mxu0 %v595
    %v721 = vpop.f32.mrb[0].mxu0
    %v722 = vadd.f32 %v638, %v721
    %v723 = vpop.f32.mrb[0].mxu0
    %724 = vmatprep.mubr.f32.mxu0 0.0
    %725 = vmatmul.mubr.f32.gmra.mrb[0].mxu0 %v596
    %v726 = vpop.f32.mrb[0].mxu0
    %v727 = vadd.f32 %v638, %v726
    %v728 = vpop.f32.mrb[0].mxu0
    %729 = vmatprep.mubr.f32.mxu0 0.0
    %730 = vmatmul.mubr.f32.gmra.mrb[0].mxu0 %v597
    %v731 = vpop.f32.mrb[0].mxu0
    %v732 = vadd.f32 %v638, %v731
    %v733 = vpop.f32.mrb[0].mxu0
    %734 = vmatprep.mubr.f32.mxu0 0.0
    %735 = vmatmul.mubr.f32.gmra.mrb[0].mxu0 %v598
    %v736 = vpop.f32.mrb[0].mxu0
    %v737 = vadd.f32 %v638, %v736
    %v738 = vpop.f32.mrb[0].mxu0
    %739 = vmatprep.mubr.f32.mxu0 0.0
    %740 = vmatmul.mubr.f32.gmra.mrb[0].mxu0 %v599
    %v741 = vpop.f32.mrb[0].mxu0
    %v742 = vadd.f32 %v638, %v741
    %v743 = vpop.f32.mrb[0].mxu0
    %744 = vmatprep.mubr.f32.mxu0 0.0
    %745 = vmatmul.mubr.f32.gmra.mrb[0].mxu0 %v600
    %v746 = vpop.f32.mrb[0].mxu0
    %v747 = vadd.f32 %v638, %v746
    %v748 = vpop.f32.mrb[0].mxu0
    %749 = vmatprep.mubr.f32.mxu0 0.0
    %750 = vmatmul.mubr.f32.gmra.mrb[0].mxu0 %v601
    %v751 = vpop.f32.mrb[0].mxu0
    %v752 = vadd.f32 %v638, %v751
    %v753 = vpop.f32.mrb[0].mxu0
    %754 = vmatprep.mubr.f32.mxu0 0.0
    %755 = vmatmul.mubr.f32.gmra.mrb[0].mxu0 %v602
    %v756 = vpop.f32.mrb[0].mxu0
    %v757 = vadd.f32 %v638, %v756
    %v758 = vpop.f32.mrb[0].mxu0
    %759 = vmatprep.mubr.f32.mxu0 0.0
    %760 = vmatmul.mubr.f32.gmra.mrb[0].mxu0 %v603
    %v761 = vpop.f32.mrb[0].mxu0
    %v762 = vadd.f32 %v638, %v761
    %v763 = vpop.f32.mrb[0].mxu0
    %764 = vmatprep.mubr.f32.mxu0 0.0
    %765 = vmatmul.mubr.f32.gmra.mrb[0].mxu0 %v604
    %v766 = vpop.f32.mrb[0].mxu0
    %v767 = vadd.f32 %v638, %v766
    %v768 = vpop.f32.mrb[0].mxu0
    %769 = vmatprep.mubr.f32.mxu0 0.0
    %770 = vmatmul.mubr.f32.gmra.mrb[0].mxu0 %v605
    %v771 = vpop.f32.mrb[0].mxu0
    %v772 = vadd.f32 %v638, %v771
    %v773 = vpop.f32.mrb[0].mxu0
    %774 = vmatprep.mubr.f32.mxu0 0.0
    %775 = vmatmul.mubr.f32.gmra.mrb[0].mxu0 %v606
    %v776 = vpop.f32.mrb[0].mxu0
    %v777 = vadd.f32 %v638, %v776
    %v778 = vpop.f32.mrb[0].mxu0
    %779 = vmatprep.mubr.f32.mxu0 0.0
    %780 = vmatmul.mubr.f32.gmra.mrb[0].mxu0 %v607
    %v781 = vpop.f32.mrb[0].mxu0
    %v782 = vadd.f32 %v638, %v781
    %v783 = vpop.f32.mrb[0].mxu0
    %784 = vmatprep.mubr.f32.mxu0 0.0
    %785 = vmatmul.mubr.f32.gmra.mrb[0].mxu0 %v608
    %v786 = vpop.f32.mrb[0].mxu0
    %v787 = vadd.f32 %v638, %v786
    %v788 = vpop.f32.mrb[0].mxu0
    %789 = vmatprep.mubr.f32.mxu0 0.0
    %790 = vmatmul.mubr.f32.gmra.mrb[0].mxu0 %v609
    %v791 = vpop.f32.mrb[0].mxu0
    %v792 = vadd.f32 %v638, %v791
    %v793 = vpop.f32.mrb[0].mxu0
    %794 = vmatprep.mubr.f32.mxu0 0.0
    %795 = vmatmul.mubr.f32.gmra.mrb[0].mxu0 %v610
    %v796 = vpop.f32.mrb[0].mxu0
    %v797 = vadd.f32 %v638, %v796
    %v798 = vpop.f32.mrb[0].mxu0
    %799 = vmatprep.mubr.f32.mxu0 0.0
    %800 = vmatmul.mubr.f32.gmra.mrb[0].mxu0 %v611
    %v801 = vpop.f32.mrb[0].mxu0
    %v802 = vadd.f32 %v638, %v801
    %v803 = vpop.f32.mrb[0].mxu0
    %804 = vmatprep.mubr.f32.mxu0 0.0
    %805 = vmatmul.mubr.f32.gmra.mrb[0].mxu0 %v612
    %v806 = vpop.f32.mrb[0].mxu0
    %v807 = vadd.f32 %v638, %v806
    %v808 = vpop.f32.mrb[0].mxu0
    %809 = vmatprep.mubr.f32.mxu0 0.0
    %810 = vmatmul.mubr.f32.gmra.mrb[0].mxu0 %v613
    %v811 = vpop.f32.mrb[0].mxu0
    %v812 = vadd.f32 %v638, %v811
    %v813 = vpop.f32.mrb[0].mxu0
    %814 = vmatprep.mubr.f32.mxu0 0.0
    %815 = vmatmul.mubr.f32.gmra.mrb[0].mxu0 %v614
    %v816 = vpop.f32.mrb[0].mxu0
    %v817 = vadd.f32 %v638, %v816
    %v818 = vpop.f32.mrb[0].mxu0
    %819 = vmatprep.mubr.f32.mxu0 0.0
    %820 = vmatmul.mubr.f32.gmra.mrb[0].mxu0 %v615
    %v821 = vpop.f32.mrb[0].mxu0
    %v822 = vadd.f32 %v638, %v821
    %v823 = vpop.f32.mrb[0].mxu0
    %824 = vmatprep.mubr.f32.mxu0 0.0
    %825 = vmatmul.mubr.f32.gmra.mrb[0].mxu0 %v616
    %v826 = vpop.f32.mrb[0].mxu0
    %v827 = vadd.f32 %v638, %v826
    %v828 = vpop.f32.mrb[0].mxu0
    %829 = vdwg.mxu0
    %830 = vst [vmem:[#allocation14] sm:$0xff] %v707
    %831 = vst [vmem:[#allocation14 + $0x8] sm:$0xff] %v712
    %832 = vst [vmem:[#allocation14 + $0x10] sm:$0xff] %v717
    %833 = vst [vmem:[#allocation14 + $0x18] sm:$0xff] %v722
    %834 = vst [vmem:[#allocation14 + $0x20] sm:$0xff] %v727
    %835 = vst [vmem:[#allocation14 + $0x28] sm:$0xff] %v732
    %836 = vst [vmem:[#allocation14 + $0x30] sm:$0xff] %v737
    %837 = vst [vmem:[#allocation14 + $0x38] sm:$0xff] %v742
    %838 = vst [vmem:[#allocation14 + $0x40] sm:$0xff] %v747
    %839 = vst [vmem:[#allocation14 + $0x48] sm:$0xff] %v752
    %840 = vst [vmem:[#allocation14 + $0x50] sm:$0xff] %v757
    %841 = vst [vmem:[#allocation14 + $0x58] sm:$0xff] %v762
    %842 = vst [vmem:[#allocation14 + $0x60] sm:$0xff] %v767
    %843 = vst [vmem:[#allocation14 + $0x68] sm:$0xff] %v772
    %844 = vst [vmem:[#allocation14 + $0x70] sm:$0xff] %v777
    %845 = vst [vmem:[#allocation14 + $0x78] sm:$0xff] %v782
    %846 = vst [vmem:[#allocation14 + $0x80] sm:$0xff] %v787
    %847 = vst [vmem:[#allocation14 + $0x88] sm:$0xff] %v792
    %848 = vst [vmem:[#allocation14 + $0x90] sm:$0xff] %v797
    %849 = vst [vmem:[#allocation14 + $0x98] sm:$0xff] %v802
    %850 = vst [vmem:[#allocation14 + $0xa0] sm:$0xff] %v807
    %851 = vst [vmem:[#allocation14 + $0xa8] sm:$0xff] %v812
    %852 = vst [vmem:[#allocation14 + $0xb0] sm:$0xff] %v817
    %853 = vst [vmem:[#allocation14 + $0xb8] sm:$0xff] %v822
    %854 = vst [vmem:[#allocation14 + $0xc0] sm:$0xff] %v827
    // Predicated region
    $region58: #{tpu_custom_call.1} parent=1 // pred_check
      _
    $region59: #{tpu_custom_call.1} parent=1 // pred_check_branch
      %856 = sbr.rel (0) target = $region61
    $region60: #{tpu_custom_call.1} parent=1 // pred_region
      %s858 = ssub.s32 3200, 3200
      %859 = vsyncadd [#allocation4], %s858
      %s860 = sshll.u32 [#allocation14], 4
      %s861 = int_to_ptr.vmem [resolvable:$true] %s860
      %866 = dma.vmem_to_hbm [thread:$0]  %s861, 3200, %s7, [#allocation4], 128, 128, 8
    $region61: #{tpu_custom_call.1} parent=1 // pred_fallthru
      _
    // Predicated region
    $region62: #{tpu_custom_call.1} parent=1 // pred_check
      _
    $region63: #{tpu_custom_call.1} parent=1 // pred_check_branch
      %868 = sbr.rel (0) target = $region65
    $region64: #{tpu_custom_call.1} parent=1 // pred_region
      %869 = dma.done [#allocation4], 3200
    $region65: #{tpu_custom_call.1} parent=1 // pred_fallthru
      _
    %870 = vsyncpa [#allocation3], 1
    %871 = vsyncpa [#allocation6], 1
    %872 = vsyncpa [#allocation9], 1
    %873 = vsyncpa [#allocation12], 1
    %874 = vsyncpa [#allocation4], 1

</llo_original>
